<compile_context>
chip_gen: v7x
topology: tpu7x:2x2x1
jax: 0.10.0
libtpu: 0.0.40
codegen_flags: <defaults>
</compile_context>

<pallas_src>
import math
from functools import partial

import numpy as np
import jax
import jax.numpy as jnp
from jax.experimental import pallas as pl
from jax.experimental.pallas import tpu as pltpu

# ----------------- module-consistent configuration -----------------
INPUT_DIM = 32
MEM_SIZE = 32
SLOT_SIZE = 64
BINDING_NUM_SLOTS = 4
REASONING_NUM_SLOTS = 4
N_KEYS = 128
TOP_K = 8
K_DIM = SLOT_SIZE // 2          # 32
V_DIM = SLOT_SIZE               # 64
LN_EPS = 1e-5
BS_TILE = 512                   # token-axis tile (multiple of 8)


def get_uniform_keys(n_keys, dim, seed):
    """Same key initialisation as the PyTorch module."""
    rng = np.random.RandomState(seed)
    bound = 1 / math.sqrt(dim)
    return rng.uniform(-bound, bound, (n_keys, dim)).astype(np.float32)


def _round_up(x, m):
    return ((x + m - 1) // m) * m


# ----------------------------- Pallas kernel ------------------------------
def _hashing_symbol_kernel(x_ref, wq_ref, bq_ref, g_ref, beta_ref, avg_ref,
                           fused_ref, valswm_ref, bias_ref, out_ref):
    D = wq_ref.shape[1]                               # num_slots * K_DIM (static)
    num_slots = D // K_DIM
    snk = num_slots * N_KEYS

    x = x_ref[...]                                    # (tile, input_dim)

    # --- fused query projection for all slots: (tile, num_slots*k_dim) ---
    q = jnp.dot(x, wq_ref[...], preferred_element_type=jnp.float32) + bq_ref[...]

    # --- per-slot LayerNorm via block-diagonal averaging matmul (lane-dense) ---
    avg = avg_ref[...]                                # (D, D) block-diag, 1/K_DIM blocks
    mu = jnp.dot(q, avg, preferred_element_type=jnp.float32)
    c = q - mu
    var = jnp.dot(c * c, avg, preferred_element_type=jnp.float32)
    qn = c * jax.lax.rsqrt(var + LN_EPS) * g_ref[...] + beta_ref[...]
    # TODO(synk): nn.Dropout(p=0.1) — eval-mode identity here (no training-mode RNG dropout).

    # --- one matmul sharing LHS qn: [ key scores | residual@Wm ] (tile, snk+out_dim) ---
    fused = jnp.dot(qn, fused_ref[...], preferred_element_type=jnp.float32)
    scores = fused[:, :snk]                           # (tile, num_slots*n_keys)
    out_acc = fused[:, snk:] + bias_ref[...]          # residual path + folded bias

    neg_big = jnp.float32(-1e30)
    for s in range(num_slots):
        sc = scores[:, s * N_KEYS:(s + 1) * N_KEYS]   # lane-aligned (tile, 128) slice
        s_work = sc
        m0 = None
        # iterative top-k knockout (one XLU max-reduce per step, no mask carry)
        # TODO(synk): exact float ties are knocked out together (torch.topk picks
        # exactly k); identical for non-degenerate float scores.
        for k in range(TOP_K):
            m = jnp.max(s_work, axis=-1, keepdims=True)
            if k == 0:
                m0 = m
            s_work = jnp.where(s_work == m, neg_big, s_work)
        # masked softmax over the knocked-out (i.e. selected) top-k scores
        e = jnp.where(s_work == neg_big, jnp.exp(sc - m0), 0.0)
        denom = jnp.sum(e, axis=-1, keepdims=True)
        w_s = e * pl.reciprocal(denom, approx=True)
        # folded EmbeddingBag('sum') + mem projection, accumulated per slot
        out_acc = out_acc + jnp.dot(
            w_s, valswm_ref[s * N_KEYS:(s + 1) * N_KEYS, :],
            preferred_element_type=jnp.float32)

    out_ref[...] = out_acc.astype(out_ref.dtype)      # lane-dense (tile, num_slots*MEM_SIZE)


# --------------------------- parameter creation ----------------------------
def init_params(key):
    ks = jax.random.split(key, 8)

    def linear_init(k, out_dim, in_dim):
        kw, kb = jax.random.split(k)
        bound = 1.0 / math.sqrt(in_dim)
        w = jax.random.uniform(kw, (out_dim, in_dim), jnp.float32, -bound, bound)
        b = jax.random.uniform(kb, (out_dim,), jnp.float32, -bound, bound)
        return w, b

    wq_b, bq_b = linear_init(ks[0], BINDING_NUM_SLOTS * K_DIM, INPUT_DIM)
    wq_r, bq_r = linear_init(ks[1], REASONING_NUM_SLOTS * K_DIM, INPUT_DIM)
    wm, bm = linear_init(ks[2], MEM_SIZE, V_DIM)       # mem_proj_layer
    wr, br = linear_init(ks[3], V_DIM, K_DIM)          # residual_linear

    binding_keys = jnp.asarray(np.stack(
        [get_uniform_keys(N_KEYS, K_DIM, seed=i) for i in range(BINDING_NUM_SLOTS)], 0))
    binding_values = (V_DIM ** -0.5) * jax.random.normal(
        ks[4], (BINDING_NUM_SLOTS, N_KEYS, V_DIM), jnp.float32)

    return dict(
        wq_bind=wq_b.reshape(BINDING_NUM_SLOTS, K_DIM, INPUT_DIM),
        bq_bind=bq_b.reshape(BINDING_NUM_SLOTS, 1, K_DIM),
        wq_reas=wq_r.reshape(REASONING_NUM_SLOTS, K_DIM, INPUT_DIM),
        bq_reas=bq_r.reshape(REASONING_NUM_SLOTS, 1, K_DIM),
        ln_gamma=jnp.ones((1, K_DIM), jnp.float32),
        ln_beta=jnp.zeros((1, K_DIM), jnp.float32),
        binding_keys=binding_keys,          # (binding_num_slots, n_keys, k_dim)
        binding_values=binding_values,      # (binding_num_slots, n_keys, v_dim)
        wr_t=wr.T,                          # (k_dim, v_dim)
        br=br.reshape(1, V_DIM),
        wm_t=wm.T,                          # (v_dim, mem_size)
        bm=bm.reshape(1, MEM_SIZE),
    )


def _slot_selection(flag):
    if flag == 'binding':
        return np.arange(BINDING_NUM_SLOTS), BINDING_NUM_SLOTS
    # reasoning: slot 0 uses keys/values[0]; slots 1.. use keys/values[1]
    return np.array([0] + [1] * (REASONING_NUM_SLOTS - 1)), REASONING_NUM_SLOTS


def _np_block_diag(blocks):
    r = sum(b.shape[0] for b in blocks)
    c = sum(b.shape[1] for b in blocks)
    out = np.zeros((r, c), np.float64)
    ro = co = 0
    for b in blocks:
        out[ro:ro + b.shape[0], co:co + b.shape[1]] = b
        ro += b.shape[0]
        co += b.shape[1]
    return out


def prepare_packed(params, flag):
    """Host-side (float64) constant folding + packing into lane-dense blocks.

    Called once per flag (cached by HashingSymbolTPU), NOT per forward."""
    sel, num_slots = _slot_selection(flag)
    wq = np.asarray(params['wq_bind' if flag == 'binding' else 'wq_reas'], np.float64)
    bq = np.asarray(params['bq_bind' if flag == 'binding' else 'bq_reas'], np.float64)
    keys = np.asarray(params['binding_keys'], np.float64)[sel]     # (S, n_keys, k_dim)
    vals = np.asarray(params['binding_values'], np.float64)[sel]   # (S, n_keys, v_dim)
    wm_t = np.asarray(params['wm_t'], np.float64)                  # (v_dim, mem)
    wr_t = np.asarray(params['wr_t'], np.float64)                  # (k_dim, v_dim)
    br = np.asarray(params['br'], np.float64)
    bm = np.asarray(params['bm'], np.float64)
    gamma = np.asarray(params['ln_gamma'], np.float64)
    beta = np.asarray(params['ln_beta'], np.float64)

    D = num_slots * K_DIM
    wq_t = np.transpose(wq, (2, 0, 1)).reshape(INPUT_DIM, D)       # (32, 128)
    bq_all = bq.reshape(1, D)
    gamma_t = np.tile(gamma, (1, num_slots))
    beta_t = np.tile(beta, (1, num_slots))
    avg = np.kron(np.eye(num_slots), np.full((K_DIM, K_DIM), 1.0 / K_DIM))  # (128, 128)

    kn = keys / np.linalg.norm(keys, axis=-1, keepdims=True)
    keys_t = _np_block_diag([kn[s].T for s in range(num_slots)])             # (128, 512)
    vals_wm = _np_block_diag([vals[s] @ wm_t for s in range(num_slots)])     # (512, 128)
    wr_wm = _np_block_diag([wr_t @ wm_t] * num_slots)                        # (128, 128)
    bias = np.tile(br @ wm_t + bm, (1, num_slots))                           # (1, 128)

    # single RHS shared by the qn matmul: [ keys^T | Wr^T@Wm^T ]  -> (128, 640)
    fused_rhs = np.concatenate([keys_t, wr_wm], axis=1)

    f32 = lambda a: jnp.asarray(a, jnp.float32)
    return dict(num_slots=num_slots, wq_t=f32(wq_t), bq=f32(bq_all),
                gamma=f32(gamma_t), beta=f32(beta_t), avg=f32(avg),
                fused_rhs=f32(fused_rhs), vals_wm=f32(vals_wm), bias=f32(bias))


# ------------------------------- wrapper -----------------------------------
@partial(jax.jit, static_argnames=("tile",))
def _forward_padded(x_flat, wq_t, bq, gamma, beta, avg, fused_rhs, vals_wm,
                    bias, *, tile):
    bs_pad = x_flat.shape[0]
    D = wq_t.shape[1]
    snk, out_dim = vals_wm.shape

    return pl.pallas_call(
        _hashing_symbol_kernel,
        out_shape=jax.ShapeDtypeStruct((bs_pad, out_dim), jnp.float32),
        grid_spec=pltpu.PrefetchScalarGridSpec(
            num_scalar_prefetch=0,
            grid=(bs_pad // tile,),
            in_specs=[
                pl.BlockSpec((tile, INPUT_DIM), lambda i: (i, 0)),     # x tile
                pl.BlockSpec((INPUT_DIM, D), lambda i: (0, 0)),        # fused Wq^T
                pl.BlockSpec((1, D), lambda i: (0, 0)),                # fused bq
                pl.BlockSpec((1, D), lambda i: (0, 0)),                # LN gamma (tiled)
                pl.BlockSpec((1, D), lambda i: (0, 0)),                # LN beta (tiled)
                pl.BlockSpec((D, D), lambda i: (0, 0)),                # block-diag averaging
                pl.BlockSpec((D, snk + out_dim), lambda i: (0, 0)),    # [keys^T | Wr^T@Wm^T]
                pl.BlockSpec((snk, out_dim), lambda i: (0, 0)),        # block-diag values@Wm^T
                pl.BlockSpec((1, out_dim), lambda i: (0, 0)),          # folded bias
            ],
            out_specs=pl.BlockSpec((tile, out_dim), lambda i: (i, 0)),
        ),
        compiler_params=pltpu.CompilerParams(dimension_semantics=("parallel",)),
    )(x_flat, wq_t, bq, gamma, beta, avg, fused_rhs, vals_wm, bias)


def hashing_symbol_forward(x, packed):
    batch, seq_len, input_dim = x.shape
    assert input_dim == INPUT_DIM
    bs = batch * seq_len
    num_slots = packed['num_slots']

    x_flat = x.reshape(bs, INPUT_DIM)
    # Large tile (amortize grid-step overhead) but keep >=2 grid steps so both
    # TensorCores are used on v7x even for small batches.
    tile = min(BS_TILE, _round_up(max(8, (bs + 1) // 2), 8))
    bs_pad = _round_up(bs, tile)
    if bs_pad != bs:
        x_flat = jnp.pad(x_flat, ((0, bs_pad - bs), (0, 0)))

    out = _forward_padded(x_flat, packed['wq_t'], packed['bq'], packed['gamma'],
                          packed['beta'], packed['avg'], packed['fused_rhs'],
                          packed['vals_wm'], packed['bias'], tile=tile)

    # (bs_pad, num_slots*mem_size) -> (batch, seq_len, num_slots, mem_size)
    return out[:bs].reshape(batch, seq_len, num_slots, MEM_SIZE)


class HashingSymbolTPU:
    """Folds/packs constants once per flag; forwards reuse the cached packs."""

    def __init__(self, params):
        self._packed = {f: prepare_packed(params, f)
                        for f in ('binding', 'reasoning')}

    def __call__(self, x, flag):
        assert flag in ('binding', 'reasoning')
        return hashing_symbol_forward(x, self._packed[flag])


# ---------------------- pure-JAX reference (for check) ----------------------
def reference_forward(x, params, flag):
    batch, seq_len, _ = x.shape
    bs = batch * seq_len
    x_flat = x.reshape(bs, INPUT_DIM)
    sel, num_slots = _slot_selection(flag)
    if flag == 'binding':
        wq, bq = params['wq_bind'], params['bq_bind']
    else:
        wq, bq = params['wq_reas'], params['bq_reas']
    keys = params['binding_keys'][sel]
    vals = params['binding_values'][sel]

    outs = []
    for s in range(num_slots):
        q = x_flat @ wq[s].T + bq[s]
        mu = q.mean(-1, keepdims=True)
        var = ((q - mu) ** 2).mean(-1, keepdims=True)
        qn = (q - mu) / jnp.sqrt(var + LN_EPS)
        qn = qn * params['ln_gamma'] + params['ln_beta']
        kn = keys[s] / jnp.linalg.norm(keys[s], axis=-1, keepdims=True)
        scores = qn @ kn.T
        tv, ti = jax.lax.top_k(scores, TOP_K)
        p = jax.nn.softmax(tv, axis=-1)
        emb = jnp.einsum('bk,bkd->bd', p, vals[s][ti])
        res = qn @ params['wr_t'] + params['br']
        outs.append((emb + res) @ params['wm_t'] + params['bm'])
    out = jnp.stack(outs, axis=1)             # (bs, num_slots, mem_size)
    return out.reshape(batch, seq_len, num_slots, MEM_SIZE)


# --------------------------------- main -------------------------------------
if __name__ == "__main__":
    key = jax.random.PRNGKey(0)
    kx, kp = jax.random.split(key)
    params = init_params(kp)
    model = HashingSymbolTPU(params)

    batch, seq_len = 2, 8
    x = jax.random.normal(kx, (batch, seq_len, INPUT_DIM), jnp.float32)

    ok = True
    for flag in ('binding', 'reasoning'):
        out = jax.block_until_ready(model(x, flag))
        num_slots = BINDING_NUM_SLOTS if flag == 'binding' else REASONING_NUM_SLOTS
        assert out.shape == (batch, seq_len, num_slots, MEM_SIZE)
        ref = reference_forward(x, params, flag)
        ok = ok and bool(jnp.allclose(out, ref, atol=2e-2, rtol=2e-2))

    if ok:
        print("KERNEL_OK")
</pallas_src>

<mosaic_0001>
module attributes {stable_mosaic.version = 11 : i64} {
  func.func @_hashing_symbol_kernel(%arg0: i32, %arg1: memref<8x32xf32, #tpu.memory_space<vmem>>, %arg2: memref<32x128xf32, #tpu.memory_space<vmem>>, %arg3: memref<1x128xf32, #tpu.memory_space<vmem>>, %arg4: memref<1x128xf32, #tpu.memory_space<vmem>>, %arg5: memref<1x128xf32, #tpu.memory_space<vmem>>, %arg6: memref<128x128xf32, #tpu.memory_space<vmem>>, %arg7: memref<128x640xf32, #tpu.memory_space<vmem>>, %arg8: memref<512x128xf32, #tpu.memory_space<vmem>>, %arg9: memref<1x128xf32, #tpu.memory_space<vmem>>, %arg10: memref<8x128xf32, #tpu.memory_space<vmem>>) attributes {dimension_semantics = [#tpu.dimension_semantics<parallel>], iteration_bounds = array<i64: 2>, scalar_prefetch = 0 : i64, scratch_operands = 0 : i64, tpu.core_type = #tpu.core_type<tc>, window_params = [{transform_indices = @transform_0, window_bounds = array<i64: 8, 32>}, {pipeline_mode = #tpu.pipeline_mode<synchronous>, transform_indices = @transform_1, window_bounds = array<i64: 32, 128>}, {pipeline_mode = #tpu.pipeline_mode<synchronous>, transform_indices = @transform_2, window_bounds = array<i64: 1, 128>}, {pipeline_mode = #tpu.pipeline_mode<synchronous>, transform_indices = @transform_3, window_bounds = array<i64: 1, 128>}, {pipeline_mode = #tpu.pipeline_mode<synchronous>, transform_indices = @transform_4, window_bounds = array<i64: 1, 128>}, {pipeline_mode = #tpu.pipeline_mode<synchronous>, transform_indices = @transform_5, window_bounds = array<i64: 128, 128>}, {pipeline_mode = #tpu.pipeline_mode<synchronous>, transform_indices = @transform_6, window_bounds = array<i64: 128, 640>}, {pipeline_mode = #tpu.pipeline_mode<synchronous>, transform_indices = @transform_7, window_bounds = array<i64: 512, 128>}, {pipeline_mode = #tpu.pipeline_mode<synchronous>, transform_indices = @transform_8, window_bounds = array<i64: 1, 128>}, {transform_indices = @transform_9, window_bounds = array<i64: 8, 128>}]} {
    %c0 = arith.constant 0 : index
    %c0_0 = arith.constant 0 : index
    %0 = vector.load %arg1[%c0, %c0_0] : memref<8x32xf32, #tpu.memory_space<vmem>>, vector<8x32xf32>
    %c0_1 = arith.constant 0 : index
    %c0_2 = arith.constant 0 : index
    %1 = vector.load %arg2[%c0_1, %c0_2] : memref<32x128xf32, #tpu.memory_space<vmem>>, vector<32x128xf32>
    %cst = arith.constant dense<0.000000e+00> : vector<8x128xf32>
    %2 = tpu.matmul %0, %1, %cst {dimension_numbers = #tpu.dot_dimension_numbers<[1], [0], [0], [1], [0, 0, 1, 1], [], []>} : vector<8x32xf32>, vector<32x128xf32>, vector<8x128xf32> -> vector<8x128xf32>
    %c0_3 = arith.constant 0 : index
    %c0_4 = arith.constant 0 : index
    %3 = vector.load %arg3[%c0_3, %c0_4] : memref<1x128xf32, #tpu.memory_space<vmem>>, vector<1x128xf32>
    %4 = vector.broadcast %3 : vector<1x128xf32> to vector<8x128xf32>
    %5 = arith.addf %2, %4 : vector<8x128xf32>
    %c0_5 = arith.constant 0 : index
    %c0_6 = arith.constant 0 : index
    %6 = vector.load %arg6[%c0_5, %c0_6] : memref<128x128xf32, #tpu.memory_space<vmem>>, vector<128x128xf32>
    %cst_7 = arith.constant dense<0.000000e+00> : vector<8x128xf32>
    %7 = tpu.matmul %5, %6, %cst_7 {dimension_numbers = #tpu.dot_dimension_numbers<[1], [0], [0], [1], [0, 0, 1, 1], [], []>} : vector<8x128xf32>, vector<128x128xf32>, vector<8x128xf32> -> vector<8x128xf32>
    %8 = arith.subf %5, %7 : vector<8x128xf32>
    %9 = arith.mulf %8, %8 : vector<8x128xf32>
    %cst_8 = arith.constant dense<0.000000e+00> : vector<8x128xf32>
    %10 = tpu.matmul %9, %6, %cst_8 {dimension_numbers = #tpu.dot_dimension_numbers<[1], [0], [0], [1], [0, 0, 1, 1], [], []>} : vector<8x128xf32>, vector<128x128xf32>, vector<8x128xf32> -> vector<8x128xf32>
    %cst_9 = arith.constant 9.99999974E-6 : f32
    %11 = vector.broadcast %cst_9 : f32 to vector<8x128xf32>
    %12 = arith.addf %10, %11 : vector<8x128xf32>
    %13 = math.rsqrt %12 : vector<8x128xf32>
    %14 = arith.mulf %8, %13 : vector<8x128xf32>
    %c0_10 = arith.constant 0 : index
    %c0_11 = arith.constant 0 : index
    %15 = vector.load %arg4[%c0_10, %c0_11] : memref<1x128xf32, #tpu.memory_space<vmem>>, vector<1x128xf32>
    %16 = vector.broadcast %15 : vector<1x128xf32> to vector<8x128xf32>
    %17 = arith.mulf %14, %16 : vector<8x128xf32>
    %c0_12 = arith.constant 0 : index
    %c0_13 = arith.constant 0 : index
    %18 = vector.load %arg5[%c0_12, %c0_13] : memref<1x128xf32, #tpu.memory_space<vmem>>, vector<1x128xf32>
    %19 = vector.broadcast %18 : vector<1x128xf32> to vector<8x128xf32>
    %20 = arith.addf %17, %19 : vector<8x128xf32>
    %c0_14 = arith.constant 0 : index
    %c0_15 = arith.constant 0 : index
    %21 = vector.load %arg7[%c0_14, %c0_15] : memref<128x640xf32, #tpu.memory_space<vmem>>, vector<128x640xf32>
    %cst_16 = arith.constant dense<0.000000e+00> : vector<8x640xf32>
    %22 = tpu.matmul %20, %21, %cst_16 {dimension_numbers = #tpu.dot_dimension_numbers<[1], [0], [0], [1], [0, 0, 1, 1], [], []>} : vector<8x128xf32>, vector<128x640xf32>, vector<8x640xf32> -> vector<8x640xf32>
    %23 = vector.extract_strided_slice %22 {offsets = [0, 0], sizes = [8, 512], strides = [1, 1]} : vector<8x640xf32> to vector<8x512xf32>
    %24 = vector.extract_strided_slice %22 {offsets = [0, 512], sizes = [8, 128], strides = [1, 1]} : vector<8x640xf32> to vector<8x128xf32>
    %c0_17 = arith.constant 0 : index
    %c0_18 = arith.constant 0 : index
    %25 = vector.load %arg9[%c0_17, %c0_18] : memref<1x128xf32, #tpu.memory_space<vmem>>, vector<1x128xf32>
    %26 = vector.broadcast %25 : vector<1x128xf32> to vector<8x128xf32>
    %27 = arith.addf %24, %26 : vector<8x128xf32>
    %28 = vector.extract_strided_slice %23 {offsets = [0, 0], sizes = [8, 128], strides = [1, 1]} : vector<8x512xf32> to vector<8x128xf32>
    %cst_19 = arith.constant dense<0xFF800000> : vector<8xf32>
    %29 = vector.multi_reduction <maximumf>, %28, %cst_19 [1] : vector<8x128xf32> to vector<8xf32>
    %30 = vector.shape_cast %29 : vector<8xf32> to vector<8x1xf32>
    %31 = vector.broadcast %30 : vector<8x1xf32> to vector<8x128xf32>
    %32 = arith.cmpf oeq, %28, %31 : vector<8x128xf32>
    %cst_20 = arith.constant -1.000000e+30 : f32
    %33 = vector.broadcast %cst_20 : f32 to vector<8x128xf32>
    %34 = arith.select %32, %33, %28 : vector<8x128xi1>, vector<8x128xf32>
    %cst_21 = arith.constant dense<0xFF800000> : vector<8xf32>
    %35 = vector.multi_reduction <maximumf>, %34, %cst_21 [1] : vector<8x128xf32> to vector<8xf32>
    %36 = vector.shape_cast %35 : vector<8xf32> to vector<8x1xf32>
    %37 = vector.broadcast %36 : vector<8x1xf32> to vector<8x128xf32>
    %38 = arith.cmpf oeq, %34, %37 : vector<8x128xf32>
    %cst_22 = arith.constant -1.000000e+30 : f32
    %39 = vector.broadcast %cst_22 : f32 to vector<8x128xf32>
    %40 = arith.select %38, %39, %34 : vector<8x128xi1>, vector<8x128xf32>
    %cst_23 = arith.constant dense<0xFF800000> : vector<8xf32>
    %41 = vector.multi_reduction <maximumf>, %40, %cst_23 [1] : vector<8x128xf32> to vector<8xf32>
    %42 = vector.shape_cast %41 : vector<8xf32> to vector<8x1xf32>
    %43 = vector.broadcast %42 : vector<8x1xf32> to vector<8x128xf32>
    %44 = arith.cmpf oeq, %40, %43 : vector<8x128xf32>
    %cst_24 = arith.constant -1.000000e+30 : f32
    %45 = vector.broadcast %cst_24 : f32 to vector<8x128xf32>
    %46 = arith.select %44, %45, %40 : vector<8x128xi1>, vector<8x128xf32>
    %cst_25 = arith.constant dense<0xFF800000> : vector<8xf32>
    %47 = vector.multi_reduction <maximumf>, %46, %cst_25 [1] : vector<8x128xf32> to vector<8xf32>
    %48 = vector.shape_cast %47 : vector<8xf32> to vector<8x1xf32>
    %49 = vector.broadcast %48 : vector<8x1xf32> to vector<8x128xf32>
    %50 = arith.cmpf oeq, %46, %49 : vector<8x128xf32>
    %cst_26 = arith.constant -1.000000e+30 : f32
    %51 = vector.broadcast %cst_26 : f32 to vector<8x128xf32>
    %52 = arith.select %50, %51, %46 : vector<8x128xi1>, vector<8x128xf32>
    %cst_27 = arith.constant dense<0xFF800000> : vector<8xf32>
    %53 = vector.multi_reduction <maximumf>, %52, %cst_27 [1] : vector<8x128xf32> to vector<8xf32>
    %54 = vector.shape_cast %53 : vector<8xf32> to vector<8x1xf32>
    %55 = vector.broadcast %54 : vector<8x1xf32> to vector<8x128xf32>
    %56 = arith.cmpf oeq, %52, %55 : vector<8x128xf32>
    %cst_28 = arith.constant -1.000000e+30 : f32
    %57 = vector.broadcast %cst_28 : f32 to vector<8x128xf32>
    %58 = arith.select %56, %57, %52 : vector<8x128xi1>, vector<8x128xf32>
    %cst_29 = arith.constant dense<0xFF800000> : vector<8xf32>
    %59 = vector.multi_reduction <maximumf>, %58, %cst_29 [1] : vector<8x128xf32> to vector<8xf32>
    %60 = vector.shape_cast %59 : vector<8xf32> to vector<8x1xf32>
    %61 = vector.broadcast %60 : vector<8x1xf32> to vector<8x128xf32>
    %62 = arith.cmpf oeq, %58, %61 : vector<8x128xf32>
    %cst_30 = arith.constant -1.000000e+30 : f32
    %63 = vector.broadcast %cst_30 : f32 to vector<8x128xf32>
    %64 = arith.select %62, %63, %58 : vector<8x128xi1>, vector<8x128xf32>
    %cst_31 = arith.constant dense<0xFF800000> : vector<8xf32>
    %65 = vector.multi_reduction <maximumf>, %64, %cst_31 [1] : vector<8x128xf32> to vector<8xf32>
    %66 = vector.shape_cast %65 : vector<8xf32> to vector<8x1xf32>
    %67 = vector.broadcast %66 : vector<8x1xf32> to vector<8x128xf32>
    %68 = arith.cmpf oeq, %64, %67 : vector<8x128xf32>
    %cst_32 = arith.constant -1.000000e+30 : f32
    %69 = vector.broadcast %cst_32 : f32 to vector<8x128xf32>
    %70 = arith.select %68, %69, %64 : vector<8x128xi1>, vector<8x128xf32>
    %cst_33 = arith.constant dense<0xFF800000> : vector<8xf32>
    %71 = vector.multi_reduction <maximumf>, %70, %cst_33 [1] : vector<8x128xf32> to vector<8xf32>
    %72 = vector.shape_cast %71 : vector<8xf32> to vector<8x1xf32>
    %73 = vector.broadcast %72 : vector<8x1xf32> to vector<8x128xf32>
    %74 = arith.cmpf oeq, %70, %73 : vector<8x128xf32>
    %cst_34 = arith.constant -1.000000e+30 : f32
    %75 = vector.broadcast %cst_34 : f32 to vector<8x128xf32>
    %76 = arith.select %74, %75, %70 : vector<8x128xi1>, vector<8x128xf32>
    %cst_35 = arith.constant -1.000000e+30 : f32
    %77 = vector.broadcast %cst_35 : f32 to vector<8x128xf32>
    %78 = arith.cmpf oeq, %76, %77 : vector<8x128xf32>
    %79 = vector.broadcast %30 : vector<8x1xf32> to vector<8x128xf32>
    %80 = arith.subf %28, %79 : vector<8x128xf32>
    %81 = math.exp %80 : vector<8x128xf32>
    %cst_36 = arith.constant 0.000000e+00 : f32
    %82 = vector.broadcast %cst_36 : f32 to vector<8x128xf32>
    %83 = arith.select %78, %81, %82 : vector<8x128xi1>, vector<8x128xf32>
    %cst_37 = arith.constant dense<0.000000e+00> : vector<8xf32>
    %84 = vector.multi_reduction <add>, %83, %cst_37 [1] : vector<8x128xf32> to vector<8xf32>
    %85 = vector.shape_cast %84 : vector<8xf32> to vector<8x1xf32>
    %86 = tpu.reciprocal %85 {approx = true} : vector<8x1xf32> -> vector<8x1xf32>
    %87 = vector.broadcast %86 : vector<8x1xf32> to vector<8x128xf32>
    %88 = arith.mulf %83, %87 : vector<8x128xf32>
    %c0_38 = arith.constant 0 : index
    %c0_39 = arith.constant 0 : index
    %89 = vector.load %arg8[%c0_38, %c0_39] : memref<512x128xf32, #tpu.memory_space<vmem>>, vector<128x128xf32>
    %cst_40 = arith.constant dense<0.000000e+00> : vector<8x128xf32>
    %90 = tpu.matmul %88, %89, %cst_40 {dimension_numbers = #tpu.dot_dimension_numbers<[1], [0], [0], [1], [0, 0, 1, 1], [], []>} : vector<8x128xf32>, vector<128x128xf32>, vector<8x128xf32> -> vector<8x128xf32>
    %91 = arith.addf %27, %90 : vector<8x128xf32>
    %92 = vector.extract_strided_slice %23 {offsets = [0, 128], sizes = [8, 128], strides = [1, 1]} : vector<8x512xf32> to vector<8x128xf32>
    %cst_41 = arith.constant dense<0xFF800000> : vector<8xf32>
    %93 = vector.multi_reduction <maximumf>, %92, %cst_41 [1] : vector<8x128xf32> to vector<8xf32>
    %94 = vector.shape_cast %93 : vector<8xf32> to vector<8x1xf32>
    %95 = vector.broadcast %94 : vector<8x1xf32> to vector<8x128xf32>
    %96 = arith.cmpf oeq, %92, %95 : vector<8x128xf32>
    %cst_42 = arith.constant -1.000000e+30 : f32
    %97 = vector.broadcast %cst_42 : f32 to vector<8x128xf32>
    %98 = arith.select %96, %97, %92 : vector<8x128xi1>, vector<8x128xf32>
    %cst_43 = arith.constant dense<0xFF800000> : vector<8xf32>
    %99 = vector.multi_reduction <maximumf>, %98, %cst_43 [1] : vector<8x128xf32> to vector<8xf32>
    %100 = vector.shape_cast %99 : vector<8xf32> to vector<8x1xf32>
    %101 = vector.broadcast %100 : vector<8x1xf32> to vector<8x128xf32>
    %102 = arith.cmpf oeq, %98, %101 : vector<8x128xf32>
    %cst_44 = arith.constant -1.000000e+30 : f32
    %103 = vector.broadcast %cst_44 : f32 to vector<8x128xf32>
    %104 = arith.select %102, %103, %98 : vector<8x128xi1>, vector<8x128xf32>
    %cst_45 = arith.constant dense<0xFF800000> : vector<8xf32>
    %105 = vector.multi_reduction <maximumf>, %104, %cst_45 [1] : vector<8x128xf32> to vector<8xf32>
    %106 = vector.shape_cast %105 : vector<8xf32> to vector<8x1xf32>
    %107 = vector.broadcast %106 : vector<8x1xf32> to vector<8x128xf32>
    %108 = arith.cmpf oeq, %104, %107 : vector<8x128xf32>
    %cst_46 = arith.constant -1.000000e+30 : f32
    %109 = vector.broadcast %cst_46 : f32 to vector<8x128xf32>
    %110 = arith.select %108, %109, %104 : vector<8x128xi1>, vector<8x128xf32>
    %cst_47 = arith.constant dense<0xFF800000> : vector<8xf32>
    %111 = vector.multi_reduction <maximumf>, %110, %cst_47 [1] : vector<8x128xf32> to vector<8xf32>
    %112 = vector.shape_cast %111 : vector<8xf32> to vector<8x1xf32>
    %113 = vector.broadcast %112 : vector<8x1xf32> to vector<8x128xf32>
    %114 = arith.cmpf oeq, %110, %113 : vector<8x128xf32>
    %cst_48 = arith.constant -1.000000e+30 : f32
    %115 = vector.broadcast %cst_48 : f32 to vector<8x128xf32>
    %116 = arith.select %114, %115, %110 : vector<8x128xi1>, vector<8x128xf32>
    %cst_49 = arith.constant dense<0xFF800000> : vector<8xf32>
    %117 = vector.multi_reduction <maximumf>, %116, %cst_49 [1] : vector<8x128xf32> to vector<8xf32>
    %118 = vector.shape_cast %117 : vector<8xf32> to vector<8x1xf32>
    %119 = vector.broadcast %118 : vector<8x1xf32> to vector<8x128xf32>
    %120 = arith.cmpf oeq, %116, %119 : vector<8x128xf32>
    %cst_50 = arith.constant -1.000000e+30 : f32
    %121 = vector.broadcast %cst_50 : f32 to vector<8x128xf32>
    %122 = arith.select %120, %121, %116 : vector<8x128xi1>, vector<8x128xf32>
    %cst_51 = arith.constant dense<0xFF800000> : vector<8xf32>
    %123 = vector.multi_reduction <maximumf>, %122, %cst_51 [1] : vector<8x128xf32> to vector<8xf32>
    %124 = vector.shape_cast %123 : vector<8xf32> to vector<8x1xf32>
    %125 = vector.broadcast %124 : vector<8x1xf32> to vector<8x128xf32>
    %126 = arith.cmpf oeq, %122, %125 : vector<8x128xf32>
    %cst_52 = arith.constant -1.000000e+30 : f32
    %127 = vector.broadcast %cst_52 : f32 to vector<8x128xf32>
    %128 = arith.select %126, %127, %122 : vector<8x128xi1>, vector<8x128xf32>
    %cst_53 = arith.constant dense<0xFF800000> : vector<8xf32>
    %129 = vector.multi_reduction <maximumf>, %128, %cst_53 [1] : vector<8x128xf32> to vector<8xf32>
    %130 = vector.shape_cast %129 : vector<8xf32> to vector<8x1xf32>
    %131 = vector.broadcast %130 : vector<8x1xf32> to vector<8x128xf32>
    %132 = arith.cmpf oeq, %128, %131 : vector<8x128xf32>
    %cst_54 = arith.constant -1.000000e+30 : f32
    %133 = vector.broadcast %cst_54 : f32 to vector<8x128xf32>
    %134 = arith.select %132, %133, %128 : vector<8x128xi1>, vector<8x128xf32>
    %cst_55 = arith.constant dense<0xFF800000> : vector<8xf32>
    %135 = vector.multi_reduction <maximumf>, %134, %cst_55 [1] : vector<8x128xf32> to vector<8xf32>
    %136 = vector.shape_cast %135 : vector<8xf32> to vector<8x1xf32>
    %137 = vector.broadcast %136 : vector<8x1xf32> to vector<8x128xf32>
    %138 = arith.cmpf oeq, %134, %137 : vector<8x128xf32>
    %cst_56 = arith.constant -1.000000e+30 : f32
    %139 = vector.broadcast %cst_56 : f32 to vector<8x128xf32>
    %140 = arith.select %138, %139, %134 : vector<8x128xi1>, vector<8x128xf32>
    %cst_57 = arith.constant -1.000000e+30 : f32
    %141 = vector.broadcast %cst_57 : f32 to vector<8x128xf32>
    %142 = arith.cmpf oeq, %140, %141 : vector<8x128xf32>
    %143 = vector.broadcast %94 : vector<8x1xf32> to vector<8x128xf32>
    %144 = arith.subf %92, %143 : vector<8x128xf32>
    %145 = math.exp %144 : vector<8x128xf32>
    %cst_58 = arith.constant 0.000000e+00 : f32
    %146 = vector.broadcast %cst_58 : f32 to vector<8x128xf32>
    %147 = arith.select %142, %145, %146 : vector<8x128xi1>, vector<8x128xf32>
    %cst_59 = arith.constant dense<0.000000e+00> : vector<8xf32>
    %148 = vector.multi_reduction <add>, %147, %cst_59 [1] : vector<8x128xf32> to vector<8xf32>
    %149 = vector.shape_cast %148 : vector<8xf32> to vector<8x1xf32>
    %150 = tpu.reciprocal %149 {approx = true} : vector<8x1xf32> -> vector<8x1xf32>
    %151 = vector.broadcast %150 : vector<8x1xf32> to vector<8x128xf32>
    %152 = arith.mulf %147, %151 : vector<8x128xf32>
    %c128 = arith.constant 128 : index
    %c0_60 = arith.constant 0 : index
    %153 = vector.load %arg8[%c128, %c0_60] : memref<512x128xf32, #tpu.memory_space<vmem>>, vector<128x128xf32>
    %cst_61 = arith.constant dense<0.000000e+00> : vector<8x128xf32>
    %154 = tpu.matmul %152, %153, %cst_61 {dimension_numbers = #tpu.dot_dimension_numbers<[1], [0], [0], [1], [0, 0, 1, 1], [], []>} : vector<8x128xf32>, vector<128x128xf32>, vector<8x128xf32> -> vector<8x128xf32>
    %155 = arith.addf %91, %154 : vector<8x128xf32>
    %156 = vector.extract_strided_slice %23 {offsets = [0, 256], sizes = [8, 128], strides = [1, 1]} : vector<8x512xf32> to vector<8x128xf32>
    %cst_62 = arith.constant dense<0xFF800000> : vector<8xf32>
    %157 = vector.multi_reduction <maximumf>, %156, %cst_62 [1] : vector<8x128xf32> to vector<8xf32>
    %158 = vector.shape_cast %157 : vector<8xf32> to vector<8x1xf32>
    %159 = vector.broadcast %158 : vector<8x1xf32> to vector<8x128xf32>
    %160 = arith.cmpf oeq, %156, %159 : vector<8x128xf32>
    %cst_63 = arith.constant -1.000000e+30 : f32
    %161 = vector.broadcast %cst_63 : f32 to vector<8x128xf32>
    %162 = arith.select %160, %161, %156 : vector<8x128xi1>, vector<8x128xf32>
    %cst_64 = arith.constant dense<0xFF800000> : vector<8xf32>
    %163 = vector.multi_reduction <maximumf>, %162, %cst_64 [1] : vector<8x128xf32> to vector<8xf32>
    %164 = vector.shape_cast %163 : vector<8xf32> to vector<8x1xf32>
    %165 = vector.broadcast %164 : vector<8x1xf32> to vector<8x128xf32>
    %166 = arith.cmpf oeq, %162, %165 : vector<8x128xf32>
    %cst_65 = arith.constant -1.000000e+30 : f32
    %167 = vector.broadcast %cst_65 : f32 to vector<8x128xf32>
    %168 = arith.select %166, %167, %162 : vector<8x128xi1>, vector<8x128xf32>
    %cst_66 = arith.constant dense<0xFF800000> : vector<8xf32>
    %169 = vector.multi_reduction <maximumf>, %168, %cst_66 [1] : vector<8x128xf32> to vector<8xf32>
    %170 = vector.shape_cast %169 : vector<8xf32> to vector<8x1xf32>
    %171 = vector.broadcast %170 : vector<8x1xf32> to vector<8x128xf32>
    %172 = arith.cmpf oeq, %168, %171 : vector<8x128xf32>
    %cst_67 = arith.constant -1.000000e+30 : f32
    %173 = vector.broadcast %cst_67 : f32 to vector<8x128xf32>
    %174 = arith.select %172, %173, %168 : vector<8x128xi1>, vector<8x128xf32>
    %cst_68 = arith.constant dense<0xFF800000> : vector<8xf32>
    %175 = vector.multi_reduction <maximumf>, %174, %cst_68 [1] : vector<8x128xf32> to vector<8xf32>
    %176 = vector.shape_cast %175 : vector<8xf32> to vector<8x1xf32>
    %177 = vector.broadcast %176 : vector<8x1xf32> to vector<8x128xf32>
    %178 = arith.cmpf oeq, %174, %177 : vector<8x128xf32>
    %cst_69 = arith.constant -1.000000e+30 : f32
    %179 = vector.broadcast %cst_69 : f32 to vector<8x128xf32>
    %180 = arith.select %178, %179, %174 : vector<8x128xi1>, vector<8x128xf32>
    %cst_70 = arith.constant dense<0xFF800000> : vector<8xf32>
    %181 = vector.multi_reduction <maximumf>, %180, %cst_70 [1] : vector<8x128xf32> to vector<8xf32>
    %182 = vector.shape_cast %181 : vector<8xf32> to vector<8x1xf32>
    %183 = vector.broadcast %182 : vector<8x1xf32> to vector<8x128xf32>
    %184 = arith.cmpf oeq, %180, %183 : vector<8x128xf32>
    %cst_71 = arith.constant -1.000000e+30 : f32
    %185 = vector.broadcast %cst_71 : f32 to vector<8x128xf32>
    %186 = arith.select %184, %185, %180 : vector<8x128xi1>, vector<8x128xf32>
    %cst_72 = arith.constant dense<0xFF800000> : vector<8xf32>
    %187 = vector.multi_reduction <maximumf>, %186, %cst_72 [1] : vector<8x128xf32> to vector<8xf32>
    %188 = vector.shape_cast %187 : vector<8xf32> to vector<8x1xf32>
    %189 = vector.broadcast %188 : vector<8x1xf32> to vector<8x128xf32>
    %190 = arith.cmpf oeq, %186, %189 : vector<8x128xf32>
    %cst_73 = arith.constant -1.000000e+30 : f32
    %191 = vector.broadcast %cst_73 : f32 to vector<8x128xf32>
    %192 = arith.select %190, %191, %186 : vector<8x128xi1>, vector<8x128xf32>
    %cst_74 = arith.constant dense<0xFF800000> : vector<8xf32>
    %193 = vector.multi_reduction <maximumf>, %192, %cst_74 [1] : vector<8x128xf32> to vector<8xf32>
    %194 = vector.shape_cast %193 : vector<8xf32> to vector<8x1xf32>
    %195 = vector.broadcast %194 : vector<8x1xf32> to vector<8x128xf32>
    %196 = arith.cmpf oeq, %192, %195 : vector<8x128xf32>
    %cst_75 = arith.constant -1.000000e+30 : f32
    %197 = vector.broadcast %cst_75 : f32 to vector<8x128xf32>
    %198 = arith.select %196, %197, %192 : vector<8x128xi1>, vector<8x128xf32>
    %cst_76 = arith.constant dense<0xFF800000> : vector<8xf32>
    %199 = vector.multi_reduction <maximumf>, %198, %cst_76 [1] : vector<8x128xf32> to vector<8xf32>
    %200 = vector.shape_cast %199 : vector<8xf32> to vector<8x1xf32>
    %201 = vector.broadcast %200 : vector<8x1xf32> to vector<8x128xf32>
    %202 = arith.cmpf oeq, %198, %201 : vector<8x128xf32>
    %cst_77 = arith.constant -1.000000e+30 : f32
    %203 = vector.broadcast %cst_77 : f32 to vector<8x128xf32>
    %204 = arith.select %202, %203, %198 : vector<8x128xi1>, vector<8x128xf32>
    %cst_78 = arith.constant -1.000000e+30 : f32
    %205 = vector.broadcast %cst_78 : f32 to vector<8x128xf32>
    %206 = arith.cmpf oeq, %204, %205 : vector<8x128xf32>
    %207 = vector.broadcast %158 : vector<8x1xf32> to vector<8x128xf32>
    %208 = arith.subf %156, %207 : vector<8x128xf32>
    %209 = math.exp %208 : vector<8x128xf32>
    %cst_79 = arith.constant 0.000000e+00 : f32
    %210 = vector.broadcast %cst_79 : f32 to vector<8x128xf32>
    %211 = arith.select %206, %209, %210 : vector<8x128xi1>, vector<8x128xf32>
    %cst_80 = arith.constant dense<0.000000e+00> : vector<8xf32>
    %212 = vector.multi_reduction <add>, %211, %cst_80 [1] : vector<8x128xf32> to vector<8xf32>
    %213 = vector.shape_cast %212 : vector<8xf32> to vector<8x1xf32>
    %214 = tpu.reciprocal %213 {approx = true} : vector<8x1xf32> -> vector<8x1xf32>
    %215 = vector.broadcast %214 : vector<8x1xf32> to vector<8x128xf32>
    %216 = arith.mulf %211, %215 : vector<8x128xf32>
    %c256 = arith.constant 256 : index
    %c0_81 = arith.constant 0 : index
    %217 = vector.load %arg8[%c256, %c0_81] : memref<512x128xf32, #tpu.memory_space<vmem>>, vector<128x128xf32>
    %cst_82 = arith.constant dense<0.000000e+00> : vector<8x128xf32>
    %218 = tpu.matmul %216, %217, %cst_82 {dimension_numbers = #tpu.dot_dimension_numbers<[1], [0], [0], [1], [0, 0, 1, 1], [], []>} : vector<8x128xf32>, vector<128x128xf32>, vector<8x128xf32> -> vector<8x128xf32>
    %219 = arith.addf %155, %218 : vector<8x128xf32>
    %220 = vector.extract_strided_slice %23 {offsets = [0, 384], sizes = [8, 128], strides = [1, 1]} : vector<8x512xf32> to vector<8x128xf32>
    %cst_83 = arith.constant dense<0xFF800000> : vector<8xf32>
    %221 = vector.multi_reduction <maximumf>, %220, %cst_83 [1] : vector<8x128xf32> to vector<8xf32>
    %222 = vector.shape_cast %221 : vector<8xf32> to vector<8x1xf32>
    %223 = vector.broadcast %222 : vector<8x1xf32> to vector<8x128xf32>
    %224 = arith.cmpf oeq, %220, %223 : vector<8x128xf32>
    %cst_84 = arith.constant -1.000000e+30 : f32
    %225 = vector.broadcast %cst_84 : f32 to vector<8x128xf32>
    %226 = arith.select %224, %225, %220 : vector<8x128xi1>, vector<8x128xf32>
    %cst_85 = arith.constant dense<0xFF800000> : vector<8xf32>
    %227 = vector.multi_reduction <maximumf>, %226, %cst_85 [1] : vector<8x128xf32> to vector<8xf32>
    %228 = vector.shape_cast %227 : vector<8xf32> to vector<8x1xf32>
    %229 = vector.broadcast %228 : vector<8x1xf32> to vector<8x128xf32>
    %230 = arith.cmpf oeq, %226, %229 : vector<8x128xf32>
    %cst_86 = arith.constant -1.000000e+30 : f32
    %231 = vector.broadcast %cst_86 : f32 to vector<8x128xf32>
    %232 = arith.select %230, %231, %226 : vector<8x128xi1>, vector<8x128xf32>
    %cst_87 = arith.constant dense<0xFF800000> : vector<8xf32>
    %233 = vector.multi_reduction <maximumf>, %232, %cst_87 [1] : vector<8x128xf32> to vector<8xf32>
    %234 = vector.shape_cast %233 : vector<8xf32> to vector<8x1xf32>
    %235 = vector.broadcast %234 : vector<8x1xf32> to vector<8x128xf32>
    %236 = arith.cmpf oeq, %232, %235 : vector<8x128xf32>
    %cst_88 = arith.constant -1.000000e+30 : f32
    %237 = vector.broadcast %cst_88 : f32 to vector<8x128xf32>
    %238 = arith.select %236, %237, %232 : vector<8x128xi1>, vector<8x128xf32>
    %cst_89 = arith.constant dense<0xFF800000> : vector<8xf32>
    %239 = vector.multi_reduction <maximumf>, %238, %cst_89 [1] : vector<8x128xf32> to vector<8xf32>
    %240 = vector.shape_cast %239 : vector<8xf32> to vector<8x1xf32>
    %241 = vector.broadcast %240 : vector<8x1xf32> to vector<8x128xf32>
    %242 = arith.cmpf oeq, %238, %241 : vector<8x128xf32>
    %cst_90 = arith.constant -1.000000e+30 : f32
    %243 = vector.broadcast %cst_90 : f32 to vector<8x128xf32>
    %244 = arith.select %242, %243, %238 : vector<8x128xi1>, vector<8x128xf32>
    %cst_91 = arith.constant dense<0xFF800000> : vector<8xf32>
    %245 = vector.multi_reduction <maximumf>, %244, %cst_91 [1] : vector<8x128xf32> to vector<8xf32>
    %246 = vector.shape_cast %245 : vector<8xf32> to vector<8x1xf32>
    %247 = vector.broadcast %246 : vector<8x1xf32> to vector<8x128xf32>
    %248 = arith.cmpf oeq, %244, %247 : vector<8x128xf32>
    %cst_92 = arith.constant -1.000000e+30 : f32
    %249 = vector.broadcast %cst_92 : f32 to vector<8x128xf32>
    %250 = arith.select %248, %249, %244 : vector<8x128xi1>, vector<8x128xf32>
    %cst_93 = arith.constant dense<0xFF800000> : vector<8xf32>
    %251 = vector.multi_reduction <maximumf>, %250, %cst_93 [1] : vector<8x128xf32> to vector<8xf32>
    %252 = vector.shape_cast %251 : vector<8xf32> to vector<8x1xf32>
    %253 = vector.broadcast %252 : vector<8x1xf32> to vector<8x128xf32>
    %254 = arith.cmpf oeq, %250, %253 : vector<8x128xf32>
    %cst_94 = arith.constant -1.000000e+30 : f32
    %255 = vector.broadcast %cst_94 : f32 to vector<8x128xf32>
    %256 = arith.select %254, %255, %250 : vector<8x128xi1>, vector<8x128xf32>
    %cst_95 = arith.constant dense<0xFF800000> : vector<8xf32>
    %257 = vector.multi_reduction <maximumf>, %256, %cst_95 [1] : vector<8x128xf32> to vector<8xf32>
    %258 = vector.shape_cast %257 : vector<8xf32> to vector<8x1xf32>
    %259 = vector.broadcast %258 : vector<8x1xf32> to vector<8x128xf32>
    %260 = arith.cmpf oeq, %256, %259 : vector<8x128xf32>
    %cst_96 = arith.constant -1.000000e+30 : f32
    %261 = vector.broadcast %cst_96 : f32 to vector<8x128xf32>
    %262 = arith.select %260, %261, %256 : vector<8x128xi1>, vector<8x128xf32>
    %cst_97 = arith.constant dense<0xFF800000> : vector<8xf32>
    %263 = vector.multi_reduction <maximumf>, %262, %cst_97 [1] : vector<8x128xf32> to vector<8xf32>
    %264 = vector.shape_cast %263 : vector<8xf32> to vector<8x1xf32>
    %265 = vector.broadcast %264 : vector<8x1xf32> to vector<8x128xf32>
    %266 = arith.cmpf oeq, %262, %265 : vector<8x128xf32>
    %cst_98 = arith.constant -1.000000e+30 : f32
    %267 = vector.broadcast %cst_98 : f32 to vector<8x128xf32>
    %268 = arith.select %266, %267, %262 : vector<8x128xi1>, vector<8x128xf32>
    %cst_99 = arith.constant -1.000000e+30 : f32
    %269 = vector.broadcast %cst_99 : f32 to vector<8x128xf32>
    %270 = arith.cmpf oeq, %268, %269 : vector<8x128xf32>
    %271 = vector.broadcast %222 : vector<8x1xf32> to vector<8x128xf32>
    %272 = arith.subf %220, %271 : vector<8x128xf32>
    %273 = math.exp %272 : vector<8x128xf32>
    %cst_100 = arith.constant 0.000000e+00 : f32
    %274 = vector.broadcast %cst_100 : f32 to vector<8x128xf32>
    %275 = arith.select %270, %273, %274 : vector<8x128xi1>, vector<8x128xf32>
    %cst_101 = arith.constant dense<0.000000e+00> : vector<8xf32>
    %276 = vector.multi_reduction <add>, %275, %cst_101 [1] : vector<8x128xf32> to vector<8xf32>
    %277 = vector.shape_cast %276 : vector<8xf32> to vector<8x1xf32>
    %278 = tpu.reciprocal %277 {approx = true} : vector<8x1xf32> -> vector<8x1xf32>
    %279 = vector.broadcast %278 : vector<8x1xf32> to vector<8x128xf32>
    %280 = arith.mulf %275, %279 : vector<8x128xf32>
    %c384 = arith.constant 384 : index
    %c0_102 = arith.constant 0 : index
    %281 = vector.load %arg8[%c384, %c0_102] : memref<512x128xf32, #tpu.memory_space<vmem>>, vector<128x128xf32>
    %cst_103 = arith.constant dense<0.000000e+00> : vector<8x128xf32>
    %282 = tpu.matmul %280, %281, %cst_103 {dimension_numbers = #tpu.dot_dimension_numbers<[1], [0], [0], [1], [0, 0, 1, 1], [], []>} : vector<8x128xf32>, vector<128x128xf32>, vector<8x128xf32> -> vector<8x128xf32>
    %283 = arith.addf %219, %282 : vector<8x128xf32>
    %c0_104 = arith.constant 0 : index
    %c0_105 = arith.constant 0 : index
    %284 = vector.load %arg10[%c0_104, %c0_105] : memref<8x128xf32, #tpu.memory_space<vmem>>, vector<8x128xf32>
    tpu.vector_store %arg10[%c0_104, %c0_105], %283 {strides = array<i32>} : memref<8x128xf32, #tpu.memory_space<vmem>>, vector<8x128xf32>,
    return
  }
  func.func @transform_0(%arg0: i32) -> (i32, i32) {
    %c0_i32 = arith.constant 0 : i32
    %c0_i32_0 = arith.constant 0 : i32
    return %arg0, %c0_i32 : i32, i32
  }
  func.func @transform_1(%arg0: i32) -> (i32, i32) {
    %c0_i32 = arith.constant 0 : i32
    %c0_i32_0 = arith.constant 0 : i32
    %c0_i32_1 = arith.constant 0 : i32
    return %c0_i32, %c0_i32_0 : i32, i32
  }
  func.func @transform_2(%arg0: i32) -> (i32, i32) {
    %c0_i32 = arith.constant 0 : i32
    %c0_i32_0 = arith.constant 0 : i32
    %c0_i32_1 = arith.constant 0 : i32
    return %c0_i32, %c0_i32_0 : i32, i32
  }
  func.func @transform_3(%arg0: i32) -> (i32, i32) {
    %c0_i32 = arith.constant 0 : i32
    %c0_i32_0 = arith.constant 0 : i32
    %c0_i32_1 = arith.constant 0 : i32
    return %c0_i32, %c0_i32_0 : i32, i32
  }
  func.func @transform_4(%arg0: i32) -> (i32, i32) {
    %c0_i32 = arith.constant 0 : i32
    %c0_i32_0 = arith.constant 0 : i32
    %c0_i32_1 = arith.constant 0 : i32
    return %c0_i32, %c0_i32_0 : i32, i32
  }
  func.func @transform_5(%arg0: i32) -> (i32, i32) {
    %c0_i32 = arith.constant 0 : i32
    %c0_i32_0 = arith.constant 0 : i32
    %c0_i32_1 = arith.constant 0 : i32
    return %c0_i32, %c0_i32_0 : i32, i32
  }
  func.func @transform_6(%arg0: i32) -> (i32, i32) {
    %c0_i32 = arith.constant 0 : i32
    %c0_i32_0 = arith.constant 0 : i32
    %c0_i32_1 = arith.constant 0 : i32
    return %c0_i32, %c0_i32_0 : i32, i32
  }
  func.func @transform_7(%arg0: i32) -> (i32, i32) {
    %c0_i32 = arith.constant 0 : i32
    %c0_i32_0 = arith.constant 0 : i32
    %c0_i32_1 = arith.constant 0 : i32
    return %c0_i32, %c0_i32_0 : i32, i32
  }
  func.func @transform_8(%arg0: i32) -> (i32, i32) {
    %c0_i32 = arith.constant 0 : i32
    %c0_i32_0 = arith.constant 0 : i32
    %c0_i32_1 = arith.constant 0 : i32
    return %c0_i32, %c0_i32_0 : i32, i32
  }
  func.func @transform_9(%arg0: i32) -> (i32, i32) {
    %c0_i32 = arith.constant 0 : i32
    %c0_i32_0 = arith.constant 0 : i32
    return %arg0, %c0_i32 : i32, i32
  }
}

</mosaic_0001>

<llo_original>
// kernel: _forward_padded.1
$region0: #{_forward_padded.1}
  #allocation0 [shape = 'u32[]', space=smem, size = 0x4, offset = 0x4, fixed_abs, tag = 'smem constant byte address 0x4 - core index']
  #allocation1 [shape = 'u32[144,128]{1,0:T(1,128)}', space=vmem, size = 0x12000, scoped, tag = 'internal scratch']
  %s0 = inlined_call_operand.hbm [shape: f32[16,32], index: 0, kind: input, shape index: {}]
  %s1 = inlined_call_operand.hbm [shape: f32[32,128], index: 1, kind: input, shape index: {}]
  %s2 = inlined_call_operand.vmem [shape: f32[1,128], index: 2, kind: input, shape index: {}]
  %s3 = inlined_call_operand.vmem [shape: f32[1,128], index: 3, kind: input, shape index: {}]
  %s4 = inlined_call_operand.vmem [shape: f32[1,128], index: 4, kind: input, shape index: {}]
  %s5 = inlined_call_operand.hbm [shape: f32[128,128], index: 5, kind: input, shape index: {}]
  %s6 = inlined_call_operand.hbm [shape: f32[128,640], index: 6, kind: input, shape index: {}]
  %s7 = inlined_call_operand.hbm [shape: f32[512,128], index: 7, kind: input, shape index: {}]
  %s8 = inlined_call_operand.vmem [shape: f32[1,128], index: 8, kind: input, shape index: {}]
  %s9 = inlined_call_operand.hbm [shape: f32[16,128], index: 9, kind: output, shape index: {}]
  %s10 = sld [smem:[#allocation0]]
  $region89: #{_forward_padded.1} parent=0
    _
  %s12 = ssub.s32 1, %s10
  %s13 = scalar_select 0, %s12, %s10
  $region1: #{_forward_padded.1} parent=0
    #allocation2 [shape = 'u8[8192]{0}', space=vmem, size = 0x2000, scoped, tag = 'input window, operand 0']
    #allocation3 [shape = 's32[2]{0}', space=sflag, size = 0x8, scoped, tag = 'scoped memory for _forward_padded.1']
    #allocation4 [shape = 's32[2]{0}', space=sflag, size = 0x8, scoped, tag = 'scoped memory for _forward_padded.1']
    #allocation5 [shape = 'u8[16384]{0}', space=vmem, size = 0x4000, scoped, tag = 'input window, operand 1, single buffered']
    #allocation6 [shape = 's32[1]{0}', space=sflag, size = 0x4, scoped, tag = 'scoped memory for _forward_padded.1']
    #allocation7 [shape = 'u8[65536]{0}', space=vmem, size = 0x10000, scoped, tag = 'input window, operand 5, single buffered']
    #allocation8 [shape = 'u8[327680]{0}', space=vmem, size = 0x50000, scoped, tag = 'input window, operand 6, single buffered']
    #allocation9 [shape = 's32[1]{0}', space=sflag, size = 0x4, scoped, tag = 'scoped memory for _forward_padded.1']
    #allocation10 [shape = 'u8[262144]{0}', space=vmem, size = 0x40000, scoped, tag = 'input window, operand 7, single buffered']
    #allocation11 [shape = 'u8[8192]{0}', space=vmem, size = 0x2000, scoped, tag = 'output window, operand 0']
    %14 = vsyncpa [#allocation3], 0
    %s15 = scalar_lea.sflag [#allocation3], 1
    %16 = vsyncpa %s15, 0
    %17 = vsyncpa [#allocation6], 0
    %18 = vsyncpa [#allocation9], 0
    %19 = vsyncpa [#allocation4], 0
    %s20 = scalar_lea.sflag [#allocation4], 1
    %21 = vsyncpa %s20, 0
    loop: start=0, step=1, limit=4
    $region2: #{_forward_padded.1} parent=1 // loop_pre_header
      _
    $region3: #{_forward_padded.1} parent=1 // loop_header
      %s23 = sphi 0, %s27
      %p24 = scmp.ge.s32.totalorder %s23, 4
      %s33 = sphi 0, %s35
      %s36 = sphi 0, %s33
      %s37 = sphi 0, %s36
      %s53 = sphi 0, %s37
      %s57 = sphi 0, %s57
      %s59 = sphi 0, %s57
      %s60 = sphi 0, %s59
      %s74 = sphi 0, %s60
      %s78 = sphi 0, %s78
      %s80 = sphi 0, %s78
      %s81 = sphi 0, %s80
      %s95 = sphi 0, %s81
      %s99 = sphi 0, %s99
      %s101 = sphi 0, %s99
      %s102 = sphi 0, %s101
      %s116 = sphi 0, %s102
      %s120 = sphi 0, %s120
      %s122 = sphi 0, %s120
      %s123 = sphi 0, %s122
      %s137 = sphi 0, %s123
      %s141 = sphi 0, %s141
      %s143 = sphi 0, %s141
      %s144 = sphi 0, %s143
      %s158 = sphi 0, %s144
      %s162 = sphi 0, %s162
      %s164 = sphi 0, %s162
      %s165 = sphi 0, %s164
      %s179 = sphi 0, %s165
      %s183 = sphi 0, %s183
      %s185 = sphi 0, %s183
      %s186 = sphi 0, %s185
      %s200 = sphi 0, %s186
      %s204 = sphi 0, %s204
      %s206 = sphi 0, %s204
      %s207 = sphi 0, %s206
      %s221 = sphi 0, %s207
      %s227 = sphi 0, %s229
      %s230 = sphi 0, %s227
      %s231 = sphi 0, %s230
      %s247 = sphi 0, %s231
    $region4: #{_forward_padded.1} parent=1 // loop_header_branch
      %26 = sbr.rel (%p24) target = $region8
    $region5: #{_forward_padded.1} parent=1 // loop_body
      %s28 = ssub.s32 %s23, 1
      %s29 = ssub.s32 %s23, 2
      %s30 = sadd.s32 %s23, 1
      %s31 = ssub.s32 %s23, %s30
      %p32 = scmp.eq.s32.totalorder %s31, 0
      %s34 = sadd.s32 %s33, 1
      %s35 = scalar_select %p32, %s33, %s34
      %p38 = pneg %p32
      %p39 = scmp.eq.s32.totalorder %s23, 1
      %p40 = por %p38, %p39
      %p41 = scmp.ne.s32.totalorder %s33, %s36
      %p42 = scmp.eq.s32.totalorder %s23, 0
      %p43 = por %p41, %p42
      %p44 = scmp.ne.s32.totalorder %s33, %s36
      %p45 = scmp.eq.s32.totalorder %s28, 1
      %p46 = por %p44, %p45
      %p47 = scmp.ne.s32.totalorder %s36, %s37
      %p48 = scmp.eq.s32.totalorder %s28, 0
      %p49 = por %p47, %p48
      %p50 = scmp.ne.s32.totalorder %s36, %s37
      %p51 = scmp.eq.s32.totalorder %s29, 1
      %p52 = por %p50, %p51
      %p54 = scmp.ne.s32.totalorder %s37, %s53
      %p55 = scmp.eq.s32.totalorder %s29, 0
      %p56 = por %p54, %p55
      %s58 = sadd.s32 %s57, 1
      %p61 = scmp.eq.s32.totalorder %s23, 1
      %p62 = scmp.ne.s32.totalorder %s57, %s59
      %p63 = scmp.eq.s32.totalorder %s23, 0
      %p64 = por %p62, %p63
      %p65 = scmp.ne.s32.totalorder %s57, %s59
      %p66 = scmp.eq.s32.totalorder %s28, 1
      %p67 = por %p65, %p66
      %p68 = scmp.ne.s32.totalorder %s59, %s60
      %p69 = scmp.eq.s32.totalorder %s28, 0
      %p70 = por %p68, %p69
      %p71 = scmp.ne.s32.totalorder %s59, %s60
      %p72 = scmp.eq.s32.totalorder %s29, 1
      %p73 = por %p71, %p72
      %p75 = scmp.ne.s32.totalorder %s60, %s74
      %p76 = scmp.eq.s32.totalorder %s29, 0
      %p77 = por %p75, %p76
      %s79 = sadd.s32 %s78, 1
      %p82 = scmp.eq.s32.totalorder %s23, 1
      %p83 = scmp.ne.s32.totalorder %s78, %s80
      %p84 = scmp.eq.s32.totalorder %s23, 0
      %p85 = por %p83, %p84
      %p86 = scmp.ne.s32.totalorder %s78, %s80
      %p87 = scmp.eq.s32.totalorder %s28, 1
      %p88 = por %p86, %p87
      %p89 = scmp.ne.s32.totalorder %s80, %s81
      %p90 = scmp.eq.s32.totalorder %s28, 0
      %p91 = por %p89, %p90
      %p92 = scmp.ne.s32.totalorder %s80, %s81
      %p93 = scmp.eq.s32.totalorder %s29, 1
      %p94 = por %p92, %p93
      %p96 = scmp.ne.s32.totalorder %s81, %s95
      %p97 = scmp.eq.s32.totalorder %s29, 0
      %p98 = por %p96, %p97
      %s100 = sadd.s32 %s99, 1
      %p103 = scmp.eq.s32.totalorder %s23, 1
      %p104 = scmp.ne.s32.totalorder %s99, %s101
      %p105 = scmp.eq.s32.totalorder %s23, 0
      %p106 = por %p104, %p105
      %p107 = scmp.ne.s32.totalorder %s99, %s101
      %p108 = scmp.eq.s32.totalorder %s28, 1
      %p109 = por %p107, %p108
      %p110 = scmp.ne.s32.totalorder %s101, %s102
      %p111 = scmp.eq.s32.totalorder %s28, 0
      %p112 = por %p110, %p111
      %p113 = scmp.ne.s32.totalorder %s101, %s102
      %p114 = scmp.eq.s32.totalorder %s29, 1
      %p115 = por %p113, %p114
      %p117 = scmp.ne.s32.totalorder %s102, %s116
      %p118 = scmp.eq.s32.totalorder %s29, 0
      %p119 = por %p117, %p118
      %s121 = sadd.s32 %s120, 1
      %p124 = scmp.eq.s32.totalorder %s23, 1
      %p125 = scmp.ne.s32.totalorder %s120, %s122
      %p126 = scmp.eq.s32.totalorder %s23, 0
      %p127 = por %p125, %p126
      %p128 = scmp.ne.s32.totalorder %s120, %s122
      %p129 = scmp.eq.s32.totalorder %s28, 1
      %p130 = por %p128, %p129
      %p131 = scmp.ne.s32.totalorder %s122, %s123
      %p132 = scmp.eq.s32.totalorder %s28, 0
      %p133 = por %p131, %p132
      %p134 = scmp.ne.s32.totalorder %s122, %s123
      %p135 = scmp.eq.s32.totalorder %s29, 1
      %p136 = por %p134, %p135
      %p138 = scmp.ne.s32.totalorder %s123, %s137
      %p139 = scmp.eq.s32.totalorder %s29, 0
      %p140 = por %p138, %p139
      %s142 = sadd.s32 %s141, 1
      %p145 = scmp.eq.s32.totalorder %s23, 1
      %p146 = scmp.ne.s32.totalorder %s141, %s143
      %p147 = scmp.eq.s32.totalorder %s23, 0
      %p148 = por %p146, %p147
      %p149 = scmp.ne.s32.totalorder %s141, %s143
      %p150 = scmp.eq.s32.totalorder %s28, 1
      %p151 = por %p149, %p150
      %p152 = scmp.ne.s32.totalorder %s143, %s144
      %p153 = scmp.eq.s32.totalorder %s28, 0
      %p154 = por %p152, %p153
      %p155 = scmp.ne.s32.totalorder %s143, %s144
      %p156 = scmp.eq.s32.totalorder %s29, 1
      %p157 = por %p155, %p156
      %p159 = scmp.ne.s32.totalorder %s144, %s158
      %p160 = scmp.eq.s32.totalorder %s29, 0
      %p161 = por %p159, %p160
      %s163 = sadd.s32 %s162, 1
      %p166 = scmp.eq.s32.totalorder %s23, 1
      %p167 = scmp.ne.s32.totalorder %s162, %s164
      %p168 = scmp.eq.s32.totalorder %s23, 0
      %p169 = por %p167, %p168
      %p170 = scmp.ne.s32.totalorder %s162, %s164
      %p171 = scmp.eq.s32.totalorder %s28, 1
      %p172 = por %p170, %p171
      %p173 = scmp.ne.s32.totalorder %s164, %s165
      %p174 = scmp.eq.s32.totalorder %s28, 0
      %p175 = por %p173, %p174
      %p176 = scmp.ne.s32.totalorder %s164, %s165
      %p177 = scmp.eq.s32.totalorder %s29, 1
      %p178 = por %p176, %p177
      %p180 = scmp.ne.s32.totalorder %s165, %s179
      %p181 = scmp.eq.s32.totalorder %s29, 0
      %p182 = por %p180, %p181
      %s184 = sadd.s32 %s183, 1
      %p187 = scmp.eq.s32.totalorder %s23, 1
      %p188 = scmp.ne.s32.totalorder %s183, %s185
      %p189 = scmp.eq.s32.totalorder %s23, 0
      %p190 = por %p188, %p189
      %p191 = scmp.ne.s32.totalorder %s183, %s185
      %p192 = scmp.eq.s32.totalorder %s28, 1
      %p193 = por %p191, %p192
      %p194 = scmp.ne.s32.totalorder %s185, %s186
      %p195 = scmp.eq.s32.totalorder %s28, 0
      %p196 = por %p194, %p195
      %p197 = scmp.ne.s32.totalorder %s185, %s186
      %p198 = scmp.eq.s32.totalorder %s29, 1
      %p199 = por %p197, %p198
      %p201 = scmp.ne.s32.totalorder %s186, %s200
      %p202 = scmp.eq.s32.totalorder %s29, 0
      %p203 = por %p201, %p202
      %s205 = sadd.s32 %s204, 1
      %p208 = scmp.eq.s32.totalorder %s23, 1
      %p209 = scmp.ne.s32.totalorder %s204, %s206
      %p210 = scmp.eq.s32.totalorder %s23, 0
      %p211 = por %p209, %p210
      %p212 = scmp.ne.s32.totalorder %s204, %s206
      %p213 = scmp.eq.s32.totalorder %s28, 1
      %p214 = por %p212, %p213
      %p215 = scmp.ne.s32.totalorder %s206, %s207
      %p216 = scmp.eq.s32.totalorder %s28, 0
      %p217 = por %p215, %p216
      %p218 = scmp.ne.s32.totalorder %s206, %s207
      %p219 = scmp.eq.s32.totalorder %s29, 1
      %p220 = por %p218, %p219
      %p222 = scmp.ne.s32.totalorder %s207, %s221
      %p223 = scmp.eq.s32.totalorder %s29, 0
      %p224 = por %p222, %p223
      %s225 = ssub.s32 %s23, %s30
      %p226 = scmp.eq.s32.totalorder %s225, 0
      %s228 = sadd.s32 %s227, 1
      %s229 = scalar_select %p226, %s227, %s228
      %p232 = pneg %p226
      %p233 = scmp.eq.s32.totalorder %s23, 1
      %p234 = por %p232, %p233
      %p235 = scmp.ne.s32.totalorder %s227, %s230
      %p236 = scmp.eq.s32.totalorder %s23, 0
      %p237 = por %p235, %p236
      %p238 = scmp.ne.s32.totalorder %s227, %s230
      %p239 = scmp.eq.s32.totalorder %s28, 1
      %p240 = por %p238, %p239
      %p241 = scmp.ne.s32.totalorder %s230, %s231
      %p242 = scmp.eq.s32.totalorder %s28, 0
      %p243 = por %p241, %p242
      %p244 = scmp.ne.s32.totalorder %s230, %s231
      %p245 = scmp.eq.s32.totalorder %s29, 1
      %p246 = por %p244, %p245
      %p248 = scmp.ne.s32.totalorder %s231, %s247
      %p249 = scmp.eq.s32.totalorder %s29, 0
      %p250 = por %p248, %p249
      %p251 = scmp.le.s32.totalorder 1, %s23
      %p252 = scmp.lt.s32.totalorder %s23, 3
      %p253 = pnand %p251, %p252
      %p254 = pneg %p253
      // Predicated region
      $region9: #{_forward_padded.1} parent=5 // pred_check
        _
      $region10: #{_forward_padded.1} parent=5 // pred_check_branch
        %256 = sbr.rel (%p253) target = $region12
      $region11: #{_forward_padded.1} parent=5 // pred_region
        %s257 = ssub.s32 %s23, 1
        // Predicated region
        $region13: #{_forward_padded.1} parent=11 // pred_check
          %p258 = pneg %p70
        $region14: #{_forward_padded.1} parent=11 // pred_check_branch
          %260 = sbr.rel (%p258) target = $region16
        $region15: #{_forward_padded.1} parent=11 // pred_region
          %s262 = ssub.s32 512, 512
          %263 = vsyncadd [#allocation6], %s262
          %s264 = sshll.u32 [#allocation5], 4
          %s265 = int_to_ptr.vmem [resolvable:$true] %s264
          %270 = dma.hbm_to_vmem [thread:$0]  %s1, 512, %s265, [#allocation6], 128, 128, 8
        $region16: #{_forward_padded.1} parent=11 // pred_fallthru
          _
        // Predicated region
        $region17: #{_forward_padded.1} parent=11 // pred_check
          %p271 = pneg %p91
        $region18: #{_forward_padded.1} parent=11 // pred_check_branch
          %273 = sbr.rel (%p271) target = $region20
        $region19: #{_forward_padded.1} parent=11 // pred_region
          _
        $region20: #{_forward_padded.1} parent=11 // pred_fallthru
          _
        // Predicated region
        $region21: #{_forward_padded.1} parent=11 // pred_check
          %p274 = pneg %p112
        $region22: #{_forward_padded.1} parent=11 // pred_check_branch
          %276 = sbr.rel (%p274) target = $region24
        $region23: #{_forward_padded.1} parent=11 // pred_region
          _
        $region24: #{_forward_padded.1} parent=11 // pred_fallthru
          _
        // Predicated region
        $region25: #{_forward_padded.1} parent=11 // pred_check
          %p277 = pneg %p133
        $region26: #{_forward_padded.1} parent=11 // pred_check_branch
          %279 = sbr.rel (%p277) target = $region28
        $region27: #{_forward_padded.1} parent=11 // pred_region
          _
        $region28: #{_forward_padded.1} parent=11 // pred_fallthru
          _
        // Predicated region
        $region29: #{_forward_padded.1} parent=11 // pred_check
          %p280 = pneg %p154
        $region30: #{_forward_padded.1} parent=11 // pred_check_branch
          %282 = sbr.rel (%p280) target = $region32
        $region31: #{_forward_padded.1} parent=11 // pred_region
          %s284 = ssub.s32 2048, 2048
          %285 = vsyncadd [#allocation6], %s284
          %s286 = sshll.u32 [#allocation7], 4
          %s287 = int_to_ptr.vmem [resolvable:$true] %s286
          %292 = dma.hbm_to_vmem [thread:$0]  %s5, 2048, %s287, [#allocation6], 128, 128, 8
        $region32: #{_forward_padded.1} parent=11 // pred_fallthru
          _
        // Predicated region
        $region33: #{_forward_padded.1} parent=11 // pred_check
          %p293 = pneg %p175
        $region34: #{_forward_padded.1} parent=11 // pred_check_branch
          %295 = sbr.rel (%p293) target = $region36
        $region35: #{_forward_padded.1} parent=11 // pred_region
          %s297 = ssub.s32 10240, 10240
          %298 = vsyncadd [#allocation9], %s297
          %s299 = sshll.u32 [#allocation8], 4
          %s300 = int_to_ptr.vmem [resolvable:$true] %s299
          %305 = dma.hbm_to_vmem [thread:$0]  %s6, 10240, %s300, [#allocation9], 640, 640, 40
        $region36: #{_forward_padded.1} parent=11 // pred_fallthru
          _
        // Predicated region
        $region37: #{_forward_padded.1} parent=11 // pred_check
          %p306 = pneg %p196
        $region38: #{_forward_padded.1} parent=11 // pred_check_branch
          %308 = sbr.rel (%p306) target = $region40
        $region39: #{_forward_padded.1} parent=11 // pred_region
          %s310 = ssub.s32 8192, 8192
          %311 = vsyncadd [#allocation9], %s310
          %s312 = sshll.u32 [#allocation10], 4
          %s313 = int_to_ptr.vmem [resolvable:$true] %s312
          %318 = dma.hbm_to_vmem [thread:$0]  %s7, 8192, %s313, [#allocation9], 128, 128, 8
        $region40: #{_forward_padded.1} parent=11 // pred_fallthru
          _
        // Predicated region
        $region41: #{_forward_padded.1} parent=11 // pred_check
          %p319 = pneg %p217
        $region42: #{_forward_padded.1} parent=11 // pred_check_branch
          %321 = sbr.rel (%p319) target = $region44
        $region43: #{_forward_padded.1} parent=11 // pred_region
          _
        $region44: #{_forward_padded.1} parent=11 // pred_fallthru
          _
      $region12: #{_forward_padded.1} parent=5 // pred_fallthru
        _
      %p322 = scmp.lt.s32.totalorder %s23, 2
      // Predicated region
      $region45: #{_forward_padded.1} parent=5 // pred_check
        %p323 = pneg %p322
      $region46: #{_forward_padded.1} parent=5 // pred_check_branch
        %325 = sbr.rel (%p323) target = $region48
      $region47: #{_forward_padded.1} parent=5 // pred_region
        // Predicated region
        $region49: #{_forward_padded.1} parent=47 // pred_check
          %p326 = pneg %p43
        $region50: #{_forward_padded.1} parent=47 // pred_check_branch
          %328 = sbr.rel (%p326) target = $region52
        $region51: #{_forward_padded.1} parent=47 // pred_region
          %s329 = sand.u32 %s33, 1
          %s330 = scalar_lea.sflag [#allocation3], %s329
          %s331 = sand.u32 %s33, 1
          %s332 = smul.addr %s331, 8
          %s333 = scalar_lea.vmem [#allocation2], %s332
          %s335 = ssub.s32 128, 128
          %336 = vsyncadd %s330, %s335
          %s337 = smul.addr %s23, 128
          %s338 = scalar_lea.hbm %s0, %s337
          %s340 = sshll.u32 %s333, 4
          %s341 = int_to_ptr.vmem [resolvable:$true] %s340
          %343 = dma.hbm_to_vmem [thread:$0]  %s338, 128, %s341, %s330
        $region52: #{_forward_padded.1} parent=47 // pred_fallthru
          _
      $region48: #{_forward_padded.1} parent=5 // pred_fallthru
        _
      %p344 = scmp.le.s32.totalorder 1, %s23
      %p345 = scmp.lt.s32.totalorder %s23, 3
      %p346 = pnand %p344, %p345
      %p347 = pneg %p346
      // Predicated region
      $region53: #{_forward_padded.1} parent=5 // pred_check
        _
      $region54: #{_forward_padded.1} parent=5 // pred_check_branch
        %349 = sbr.rel (%p346) target = $region56
      $region55: #{_forward_padded.1} parent=5 // pred_region
        %s350 = ssub.s32 %s23, 1
        %s351 = sand.u32 %s36, 1
        %s352 = scalar_lea.sflag [#allocation3], %s351
        %s353 = sand.u32 %s36, 1
        %s354 = smul.addr %s353, 8
        %s355 = scalar_lea.vmem [#allocation2], %s354
        // Predicated region
        $region57: #{_forward_padded.1} parent=55 // pred_check
          %p356 = pneg %p49
        $region58: #{_forward_padded.1} parent=55 // pred_check_branch
          %358 = sbr.rel (%p356) target = $region60
        $region59: #{_forward_padded.1} parent=55 // pred_region
          %359 = dma.done %s352, 128
        $region60: #{_forward_padded.1} parent=55 // pred_fallthru
          _
        // Predicated region
        $region61: #{_forward_padded.1} parent=55 // pred_check
          %p360 = pneg %p70
        $region62: #{_forward_padded.1} parent=55 // pred_check_branch
          %362 = sbr.rel (%p360) target = $region64
        $region63: #{_forward_padded.1} parent=55 // pred_region
          %363 = dma.done [#allocation6], 512
        $region64: #{_forward_padded.1} parent=55 // pred_fallthru
          _
        // Predicated region
        $region65: #{_forward_padded.1} parent=55 // pred_check
          %p364 = pneg %p154
        $region66: #{_forward_padded.1} parent=55 // pred_check_branch
          %366 = sbr.rel (%p364) target = $region68
        $region67: #{_forward_padded.1} parent=55 // pred_region
          %367 = dma.done [#allocation6], 2048
        $region68: #{_forward_padded.1} parent=55 // pred_fallthru
          _
        // Predicated region
        $region69: #{_forward_padded.1} parent=55 // pred_check
          %p368 = pneg %p175
        $region70: #{_forward_padded.1} parent=55 // pred_check_branch
          %370 = sbr.rel (%p368) target = $region72
        $region71: #{_forward_padded.1} parent=55 // pred_region
          %371 = dma.done [#allocation9], 10240
        $region72: #{_forward_padded.1} parent=55 // pred_fallthru
          _
        // Predicated region
        $region73: #{_forward_padded.1} parent=55 // pred_check
          %p372 = pneg %p196
        $region74: #{_forward_padded.1} parent=55 // pred_check_branch
          %374 = sbr.rel (%p372) target = $region76
        $region75: #{_forward_padded.1} parent=55 // pred_region
          %375 = dma.done [#allocation9], 8192
        $region76: #{_forward_padded.1} parent=55 // pred_fallthru
          _
        %s376 = sand.u32 %s36, 1
        %s377 = scalar_lea.sflag [#allocation3], %s376
        %s378 = sand.u32 %s36, 1
        %s379 = smul.addr %s378, 8
        %s380 = scalar_lea.vmem [#allocation2], %s379
        %p381 = pneg %p49
        %p382 = pneg %p46
        %p383 = pneg %p70
        %p384 = pneg %p67
        %p385 = pneg %p91
        %p386 = pneg %p88
        %p387 = pneg %p112
        %p388 = pneg %p109
        %p389 = pneg %p133
        %p390 = pneg %p130
        %p391 = pneg %p154
        %p392 = pneg %p151
        %p393 = pneg %p175
        %p394 = pneg %p172
        %p395 = pneg %p196
        %p396 = pneg %p193
        %p397 = pneg %p217
        %p398 = pneg %p214
        %p399 = pneg %p243
        %p400 = pneg %p240
        %s401 = sand.u32 %s230, 1
        %s402 = scalar_lea.sflag [#allocation4], %s401
        %s403 = sand.u32 %s230, 1
        %s404 = smul.addr %s403, 8
        %s405 = scalar_lea.vmem [#allocation11], %s404
        %v406 = vld [vmem:[%s355] sm:$0xff]
        %v407 = vld [vmem:[#allocation5] sm:$0xff]
        %v408 = vld [vmem:[#allocation5 + $0x8] sm:$0xff]
        %v409 = vld [vmem:[#allocation5 + $0x10] sm:$0xff]
        %v410 = vld [vmem:[#allocation5 + $0x18] sm:$0xff]
        %v411 = vld [vmem:[%s2] sm:$0x1]
        %v413 = vlaneseq
        %v414 = vshrl.u32 %v413, 7
        %v415 = vsub.s32 0, %v414
        %v416 = vrot.slane %v411, %v415
        %vm418 = vcmask 261120
        %v420 = vsel %vm418, %v406, 0
        %422 = vmatprep.subr.mxu0 0.0
        %423 = vmatpush1.msra.mxu0 %v407
        %424 = vmatprep.subr.mxu0 0.0
        %425 = vmatpush1.msra.mxu0 %v408
        %426 = vmatprep.subr.mxu0 0.0
        %427 = vmatpush1.msra.mxu0 %v409
        %428 = vmatprep.subr.mxu0 0.0
        %429 = vmatpush1.msra.mxu0 %v410
        %430 = vmatprep.subr.mxu0 0.0
        %431 = vmatpush1.msra.mxu0 0.0
        %432 = vmatprep.subr.mxu0 0.0
        %433 = vmatpush1.msra.mxu0 0.0
        %434 = vmatprep.subr.mxu0 0.0
        %435 = vmatpush1.msra.mxu0 0.0
        %436 = vmatprep.subr.mxu0 0.0
        %437 = vmatpush1.msra.mxu0 0.0
        %438 = vmatprep.subr.mxu0 0.0
        %439 = vmatpush1.msra.mxu0 0.0
        %440 = vmatprep.subr.mxu0 0.0
        %441 = vmatpush1.msra.mxu0 0.0
        %442 = vmatprep.subr.mxu0 0.0
        %443 = vmatpush1.msra.mxu0 0.0
        %444 = vmatprep.subr.mxu0 0.0
        %445 = vmatpush1.msra.mxu0 0.0
        %446 = vmatprep.subr.mxu0 0.0
        %447 = vmatpush1.msra.mxu0 0.0
        %448 = vmatprep.subr.mxu0 0.0
        %449 = vmatpush1.msra.mxu0 0.0
        %450 = vmatprep.subr.mxu0 0.0
        %451 = vmatpush1.msra.mxu0 0.0
        %452 = vmatprep.subr.mxu0 0.0
        %453 = vmatpush1.msra.mxu0 0.0
        %454 = vmatprep.subr.mxu0 0.0
        %455 = vmatpush1.msra.mxu0 0.0
        %456 = vmatprep.subr.mxu0 0.0
        %457 = vmatpush1.msra.mxu0 0.0
        %458 = vmatprep.subr.mxu0 0.0
        %459 = vmatpush1.msra.mxu0 0.0
        %460 = vmatprep.subr.mxu0 0.0
        %461 = vmatpush1.msra.mxu0 0.0
        %462 = vmatprep.subr.mxu0 0.0
        %463 = vmatpush1.msra.mxu0 0.0
        %464 = vmatprep.subr.mxu0 0.0
        %465 = vmatpush1.msra.mxu0 0.0
        %466 = vmatprep.subr.mxu0 0.0
        %467 = vmatpush1.msra.mxu0 0.0
        %468 = vmatprep.subr.mxu0 0.0
        %469 = vmatpush1.msra.mxu0 0.0
        %470 = vmatprep.subr.mxu0 0.0
        %471 = vmatpush1.msra.mxu0 0.0
        %472 = vmatprep.subr.mxu0 0.0
        %473 = vmatpush1.msra.mxu0 0.0
        %474 = vmatprep.subr.mxu0 0.0
        %475 = vmatpush1.msra.mxu0 0.0
        %476 = vmatprep.subr.mxu0 0.0
        %477 = vmatpush1.msra.mxu0 0.0
        %478 = vmatprep.subr.mxu0 0.0
        %479 = vmatpush1.msra.mxu0 0.0
        %480 = vmatprep.subr.mxu0 0.0
        %481 = vmatpush1.msra.mxu0 0.0
        %482 = vmatprep.subr.mxu0 0.0
        %483 = vmatpush1.msra.mxu0 0.0
        %484 = vmatprep.subr.mxu0 0.0
        %485 = vmatpush1.msra.mxu0 0.0
        %486 = vmatprep.mubr.f32.mxu0 0.0
        %487 = vmatmul.mubr.f32.gmra.mrb[0].mxu0 %v420
        %v488 = vpop.f32.mrb[0].mxu0
        %v489 = vadd.f32 %v416, %v488
        %v490 = vpop.f32.mrb[0].mxu0
        %491 = vdwg.mxu0
        %v492 = vld [vmem:[#allocation7] sm:$0xff]
        %v493 = vld [vmem:[#allocation7 + $0x8] sm:$0xff]
        %v494 = vld [vmem:[#allocation7 + $0x10] sm:$0xff]
        %v495 = vld [vmem:[#allocation7 + $0x18] sm:$0xff]
        %v496 = vld [vmem:[#allocation7 + $0x20] sm:$0xff]
        %v497 = vld [vmem:[#allocation7 + $0x28] sm:$0xff]
        %v498 = vld [vmem:[#allocation7 + $0x30] sm:$0xff]
        %v499 = vld [vmem:[#allocation7 + $0x38] sm:$0xff]
        %v500 = vld [vmem:[#allocation7 + $0x40] sm:$0xff]
        %v501 = vld [vmem:[#allocation7 + $0x48] sm:$0xff]
        %v502 = vld [vmem:[#allocation7 + $0x50] sm:$0xff]
        %v503 = vld [vmem:[#allocation7 + $0x58] sm:$0xff]
        %v504 = vld [vmem:[#allocation7 + $0x60] sm:$0xff]
        %v505 = vld [vmem:[#allocation7 + $0x68] sm:$0xff]
        %v506 = vld [vmem:[#allocation7 + $0x70] sm:$0xff]
        %v507 = vld [vmem:[#allocation7 + $0x78] sm:$0xff]
        %508 = vmatprep.subr.mxu0 0.0
        %509 = vmatpush1.msra.mxu0 %v492
        %510 = vmatprep.subr.mxu0 0.0
        %511 = vmatpush1.msra.mxu0 %v493
        %512 = vmatprep.subr.mxu0 0.0
        %513 = vmatpush1.msra.mxu0 %v494
        %514 = vmatprep.subr.mxu0 0.0
        %515 = vmatpush1.msra.mxu0 %v495
        %516 = vmatprep.subr.mxu0 0.0
        %517 = vmatpush1.msra.mxu0 %v496
        %518 = vmatprep.subr.mxu0 0.0
        %519 = vmatpush1.msra.mxu0 %v497
        %520 = vmatprep.subr.mxu0 0.0
        %521 = vmatpush1.msra.mxu0 %v498
        %522 = vmatprep.subr.mxu0 0.0
        %523 = vmatpush1.msra.mxu0 %v499
        %524 = vmatprep.subr.mxu0 0.0
        %525 = vmatpush1.msra.mxu0 %v500
        %526 = vmatprep.subr.mxu0 0.0
        %527 = vmatpush1.msra.mxu0 %v501
        %528 = vmatprep.subr.mxu0 0.0
        %529 = vmatpush1.msra.mxu0 %v502
        %530 = vmatprep.subr.mxu0 0.0
        %531 = vmatpush1.msra.mxu0 %v503
        %532 = vmatprep.subr.mxu0 0.0
        %533 = vmatpush1.msra.mxu0 %v504
        %534 = vmatprep.subr.mxu0 0.0
        %535 = vmatpush1.msra.mxu0 %v505
        %536 = vmatprep.subr.mxu0 0.0
        %537 = vmatpush1.msra.mxu0 %v506
        %538 = vmatprep.subr.mxu0 0.0
        %539 = vmatpush1.msra.mxu0 %v507
        %540 = vmatprep.subr.mxu0 0.0
        %541 = vmatpush1.msra.mxu0 0.0
        %542 = vmatprep.subr.mxu0 0.0
        %543 = vmatpush1.msra.mxu0 0.0
        %544 = vmatprep.subr.mxu0 0.0
        %545 = vmatpush1.msra.mxu0 0.0
        %546 = vmatprep.subr.mxu0 0.0
        %547 = vmatpush1.msra.mxu0 0.0
        %548 = vmatprep.subr.mxu0 0.0
        %549 = vmatpush1.msra.mxu0 0.0
        %550 = vmatprep.subr.mxu0 0.0
        %551 = vmatpush1.msra.mxu0 0.0
        %552 = vmatprep.subr.mxu0 0.0
        %553 = vmatpush1.msra.mxu0 0.0
        %554 = vmatprep.subr.mxu0 0.0
        %555 = vmatpush1.msra.mxu0 0.0
        %556 = vmatprep.subr.mxu0 0.0
        %557 = vmatpush1.msra.mxu0 0.0
        %558 = vmatprep.subr.mxu0 0.0
        %559 = vmatpush1.msra.mxu0 0.0
        %560 = vmatprep.subr.mxu0 0.0
        %561 = vmatpush1.msra.mxu0 0.0
        %562 = vmatprep.subr.mxu0 0.0
        %563 = vmatpush1.msra.mxu0 0.0
        %564 = vmatprep.subr.mxu0 0.0
        %565 = vmatpush1.msra.mxu0 0.0
        %566 = vmatprep.subr.mxu0 0.0
        %567 = vmatpush1.msra.mxu0 0.0
        %568 = vmatprep.subr.mxu0 0.0
        %569 = vmatpush1.msra.mxu0 0.0
        %570 = vmatprep.subr.mxu0 0.0
        %571 = vmatpush1.msra.mxu0 0.0
        %572 = vmatprep.mubr.f32.mxu0 0.0
        %573 = vmatmul.mubr.f32.gmra.mrb[0].mxu0 %v489
        %v574 = vpop.f32.mrb[0].mxu0
        %v575 = vadd.f32 0.0, %v574
        %v576 = vpop.f32.mrb[0].mxu0
        %577 = vdwg.mxu0
        %v578 = vsub.f32 %v489, %v575
        %v579 = vmul.f32 %v578, %v578
        %580 = vmatprep.subr.mxu0 0.0
        %581 = vmatpush1.msra.mxu0 %v492
        %582 = vmatprep.subr.mxu0 0.0
        %583 = vmatpush1.msra.mxu0 %v493
        %584 = vmatprep.subr.mxu0 0.0
        %585 = vmatpush1.msra.mxu0 %v494
        %586 = vmatprep.subr.mxu0 0.0
        %587 = vmatpush1.msra.mxu0 %v495
        %588 = vmatprep.subr.mxu0 0.0
        %589 = vmatpush1.msra.mxu0 %v496
        %590 = vmatprep.subr.mxu0 0.0
        %591 = vmatpush1.msra.mxu0 %v497
        %592 = vmatprep.subr.mxu0 0.0
        %593 = vmatpush1.msra.mxu0 %v498
        %594 = vmatprep.subr.mxu0 0.0
        %595 = vmatpush1.msra.mxu0 %v499
        %596 = vmatprep.subr.mxu0 0.0
        %597 = vmatpush1.msra.mxu0 %v500
        %598 = vmatprep.subr.mxu0 0.0
        %599 = vmatpush1.msra.mxu0 %v501
        %600 = vmatprep.subr.mxu0 0.0
        %601 = vmatpush1.msra.mxu0 %v502
        %602 = vmatprep.subr.mxu0 0.0
        %603 = vmatpush1.msra.mxu0 %v503
        %604 = vmatprep.subr.mxu0 0.0
        %605 = vmatpush1.msra.mxu0 %v504
        %606 = vmatprep.subr.mxu0 0.0
        %607 = vmatpush1.msra.mxu0 %v505
        %608 = vmatprep.subr.mxu0 0.0
        %609 = vmatpush1.msra.mxu0 %v506
        %610 = vmatprep.subr.mxu0 0.0
        %611 = vmatpush1.msra.mxu0 %v507
        %612 = vmatprep.subr.mxu0 0.0
        %613 = vmatpush1.msra.mxu0 0.0
        %614 = vmatprep.subr.mxu0 0.0
        %615 = vmatpush1.msra.mxu0 0.0
        %616 = vmatprep.subr.mxu0 0.0
        %617 = vmatpush1.msra.mxu0 0.0
        %618 = vmatprep.subr.mxu0 0.0
        %619 = vmatpush1.msra.mxu0 0.0
        %620 = vmatprep.subr.mxu0 0.0
        %621 = vmatpush1.msra.mxu0 0.0
        %622 = vmatprep.subr.mxu0 0.0
        %623 = vmatpush1.msra.mxu0 0.0
        %624 = vmatprep.subr.mxu0 0.0
        %625 = vmatpush1.msra.mxu0 0.0
        %626 = vmatprep.subr.mxu0 0.0
        %627 = vmatpush1.msra.mxu0 0.0
        %628 = vmatprep.subr.mxu0 0.0
        %629 = vmatpush1.msra.mxu0 0.0
        %630 = vmatprep.subr.mxu0 0.0
        %631 = vmatpush1.msra.mxu0 0.0
        %632 = vmatprep.subr.mxu0 0.0
        %633 = vmatpush1.msra.mxu0 0.0
        %634 = vmatprep.subr.mxu0 0.0
        %635 = vmatpush1.msra.mxu0 0.0
        %636 = vmatprep.subr.mxu0 0.0
        %637 = vmatpush1.msra.mxu0 0.0
        %638 = vmatprep.subr.mxu0 0.0
        %639 = vmatpush1.msra.mxu0 0.0
        %640 = vmatprep.subr.mxu0 0.0
        %641 = vmatpush1.msra.mxu0 0.0
        %642 = vmatprep.subr.mxu0 0.0
        %643 = vmatpush1.msra.mxu0 0.0
        %644 = vmatprep.mubr.f32.mxu0 0.0
        %645 = vmatmul.mubr.f32.gmra.mrb[0].mxu0 %v579
        %v646 = vpop.f32.mrb[0].mxu0
        %v647 = vadd.f32 1e-05, %v646
        %v648 = vpop.f32.mrb[0].mxu0
        %649 = vdwg.mxu0
        %v650 = vrsqrt.pop %v647
        %v651 = vmul.f32 %v578, %v650
        %v652 = vld [vmem:[%s3] sm:$0x1]
        %v654 = vlaneseq
        %v655 = vshrl.u32 %v654, 7
        %v656 = vsub.s32 0, %v655
        %v657 = vrot.slane %v652, %v656
        %v659 = vmul.f32 %v651, %v657
        %v660 = vld [vmem:[%s4] sm:$0x1]
        %v662 = vlaneseq
        %v663 = vshrl.u32 %v662, 7
        %v664 = vsub.s32 0, %v663
        %v665 = vrot.slane %v660, %v664
        %v667 = vadd.f32 %v659, %v665
        %v668 = vld [vmem:[#allocation8] sm:$0xff]
        %v669 = vld [vmem:[#allocation8 + $0x8] sm:$0xff]
        %v670 = vld [vmem:[#allocation8 + $0x10] sm:$0xff]
        %v671 = vld [vmem:[#allocation8 + $0x18] sm:$0xff]
        %v672 = vld [vmem:[#allocation8 + $0x20] sm:$0xff]
        %v673 = vld [vmem:[#allocation8 + $0x28] sm:$0xff]
        %v674 = vld [vmem:[#allocation8 + $0x30] sm:$0xff]
        %v675 = vld [vmem:[#allocation8 + $0x38] sm:$0xff]
        %v676 = vld [vmem:[#allocation8 + $0x40] sm:$0xff]
        %v677 = vld [vmem:[#allocation8 + $0x48] sm:$0xff]
        %v678 = vld [vmem:[#allocation8 + $0x50] sm:$0xff]
        %v679 = vld [vmem:[#allocation8 + $0x58] sm:$0xff]
        %v680 = vld [vmem:[#allocation8 + $0x60] sm:$0xff]
        %v681 = vld [vmem:[#allocation8 + $0x68] sm:$0xff]
        %v682 = vld [vmem:[#allocation8 + $0x70] sm:$0xff]
        %v683 = vld [vmem:[#allocation8 + $0x78] sm:$0xff]
        %v684 = vld [vmem:[#allocation8 + $0x80] sm:$0xff]
        %v685 = vld [vmem:[#allocation8 + $0x88] sm:$0xff]
        %v686 = vld [vmem:[#allocation8 + $0x90] sm:$0xff]
        %v687 = vld [vmem:[#allocation8 + $0x98] sm:$0xff]
        %v688 = vld [vmem:[#allocation8 + $0xa0] sm:$0xff]
        %v689 = vld [vmem:[#allocation8 + $0xa8] sm:$0xff]
        %v690 = vld [vmem:[#allocation8 + $0xb0] sm:$0xff]
        %v691 = vld [vmem:[#allocation8 + $0xb8] sm:$0xff]
        %v692 = vld [vmem:[#allocation8 + $0xc0] sm:$0xff]
        %v693 = vld [vmem:[#allocation8 + $0xc8] sm:$0xff]
        %v694 = vld [vmem:[#allocation8 + $0xd0] sm:$0xff]
        %v695 = vld [vmem:[#allocation8 + $0xd8] sm:$0xff]
        %v696 = vld [vmem:[#allocation8 + $0xe0] sm:$0xff]
        %v697 = vld [vmem:[#allocation8 + $0xe8] sm:$0xff]
        %v698 = vld [vmem:[#allocation8 + $0xf0] sm:$0xff]
        %v699 = vld [vmem:[#allocation8 + $0xf8] sm:$0xff]
        %v700 = vld [vmem:[#allocation8 + $0x100] sm:$0xff]
        %v701 = vld [vmem:[#allocation8 + $0x108] sm:$0xff]
        %v702 = vld [vmem:[#allocation8 + $0x110] sm:$0xff]
        %v703 = vld [vmem:[#allocation8 + $0x118] sm:$0xff]
        %v704 = vld [vmem:[#allocation8 + $0x120] sm:$0xff]
        %v705 = vld [vmem:[#allocation8 + $0x128] sm:$0xff]
        %v706 = vld [vmem:[#allocation8 + $0x130] sm:$0xff]
        %v707 = vld [vmem:[#allocation8 + $0x138] sm:$0xff]
        %v708 = vld [vmem:[#allocation8 + $0x140] sm:$0xff]
        %v709 = vld [vmem:[#allocation8 + $0x148] sm:$0xff]
        %v710 = vld [vmem:[#allocation8 + $0x150] sm:$0xff]
        %v711 = vld [vmem:[#allocation8 + $0x158] sm:$0xff]
        %v712 = vld [vmem:[#allocation8 + $0x160] sm:$0xff]
        %v713 = vld [vmem:[#allocation8 + $0x168] sm:$0xff]
        %v714 = vld [vmem:[#allocation8 + $0x170] sm:$0xff]
        %v715 = vld [vmem:[#allocation8 + $0x178] sm:$0xff]
        %v716 = vld [vmem:[#allocation8 + $0x180] sm:$0xff]
        %v717 = vld [vmem:[#allocation8 + $0x188] sm:$0xff]
        %v718 = vld [vmem:[#allocation8 + $0x190] sm:$0xff]
        %v719 = vld [vmem:[#allocation8 + $0x198] sm:$0xff]
        %v720 = vld [vmem:[#allocation8 + $0x1a0] sm:$0xff]
        %v721 = vld [vmem:[#allocation8 + $0x1a8] sm:$0xff]
        %v722 = vld [vmem:[#allocation8 + $0x1b0] sm:$0xff]
        %v723 = vld [vmem:[#allocation8 + $0x1b8] sm:$0xff]
        %v724 = vld [vmem:[#allocation8 + $0x1c0] sm:$0xff]
        %v725 = vld [vmem:[#allocation8 + $0x1c8] sm:$0xff]
        %v726 = vld [vmem:[#allocation8 + $0x1d0] sm:$0xff]
        %v727 = vld [vmem:[#allocation8 + $0x1d8] sm:$0xff]
        %v728 = vld [vmem:[#allocation8 + $0x1e0] sm:$0xff]
        %v729 = vld [vmem:[#allocation8 + $0x1e8] sm:$0xff]
        %v730 = vld [vmem:[#allocation8 + $0x1f0] sm:$0xff]
        %v731 = vld [vmem:[#allocation8 + $0x1f8] sm:$0xff]
        %v732 = vld [vmem:[#allocation8 + $0x200] sm:$0xff]
        %v733 = vld [vmem:[#allocation8 + $0x208] sm:$0xff]
        %v734 = vld [vmem:[#allocation8 + $0x210] sm:$0xff]
        %v735 = vld [vmem:[#allocation8 + $0x218] sm:$0xff]
        %v736 = vld [vmem:[#allocation8 + $0x220] sm:$0xff]
        %v737 = vld [vmem:[#allocation8 + $0x228] sm:$0xff]
        %v738 = vld [vmem:[#allocation8 + $0x230] sm:$0xff]
        %v739 = vld [vmem:[#allocation8 + $0x238] sm:$0xff]
        %v740 = vld [vmem:[#allocation8 + $0x240] sm:$0xff]
        %v741 = vld [vmem:[#allocation8 + $0x248] sm:$0xff]
        %v742 = vld [vmem:[#allocation8 + $0x250] sm:$0xff]
        %v743 = vld [vmem:[#allocation8 + $0x258] sm:$0xff]
        %v744 = vld [vmem:[#allocation8 + $0x260] sm:$0xff]
        %v745 = vld [vmem:[#allocation8 + $0x268] sm:$0xff]
        %v746 = vld [vmem:[#allocation8 + $0x270] sm:$0xff]
        %v747 = vld [vmem:[#allocation8 + $0x278] sm:$0xff]
        %748 = vmatprep.subr.mxu0 %v669
        %749 = vmatpush1.msra.mxu0 %v668
        %750 = vmatprep.subr.mxu0 %v674
        %751 = vmatpush1.msra.mxu0 %v673
        %752 = vmatprep.subr.mxu0 %v679
        %753 = vmatpush1.msra.mxu0 %v678
        %754 = vmatprep.subr.mxu0 %v684
        %755 = vmatpush1.msra.mxu0 %v683
        %756 = vmatprep.subr.mxu0 %v689
        %757 = vmatpush1.msra.mxu0 %v688
        %758 = vmatprep.subr.mxu0 %v694
        %759 = vmatpush1.msra.mxu0 %v693
        %760 = vmatprep.subr.mxu0 %v699
        %761 = vmatpush1.msra.mxu0 %v698
        %762 = vmatprep.subr.mxu0 %v704
        %763 = vmatpush1.msra.mxu0 %v703
        %764 = vmatprep.subr.mxu0 %v709
        %765 = vmatpush1.msra.mxu0 %v708
        %766 = vmatprep.subr.mxu0 %v714
        %767 = vmatpush1.msra.mxu0 %v713
        %768 = vmatprep.subr.mxu0 %v719
        %769 = vmatpush1.msra.mxu0 %v718
        %770 = vmatprep.subr.mxu0 %v724
        %771 = vmatpush1.msra.mxu0 %v723
        %772 = vmatprep.subr.mxu0 %v729
        %773 = vmatpush1.msra.mxu0 %v728
        %774 = vmatprep.subr.mxu0 %v734
        %775 = vmatpush1.msra.mxu0 %v733
        %776 = vmatprep.subr.mxu0 %v739
        %777 = vmatpush1.msra.mxu0 %v738
        %778 = vmatprep.subr.mxu0 %v744
        %779 = vmatpush1.msra.mxu0 %v743
        %780 = vmatprep.subr.mxu0 0.0
        %781 = vmatpush1.msra.mxu0 0.0
        %782 = vmatprep.subr.mxu0 0.0
        %783 = vmatpush1.msra.mxu0 0.0
        %784 = vmatprep.subr.mxu0 0.0
        %785 = vmatpush1.msra.mxu0 0.0
        %786 = vmatprep.subr.mxu0 0.0
        %787 = vmatpush1.msra.mxu0 0.0
        %788 = vmatprep.subr.mxu0 0.0
        %789 = vmatpush1.msra.mxu0 0.0
        %790 = vmatprep.subr.mxu0 0.0
        %791 = vmatpush1.msra.mxu0 0.0
        %792 = vmatprep.subr.mxu0 0.0
        %793 = vmatpush1.msra.mxu0 0.0
        %794 = vmatprep.subr.mxu0 0.0
        %795 = vmatpush1.msra.mxu0 0.0
        %796 = vmatprep.subr.mxu0 0.0
        %797 = vmatpush1.msra.mxu0 0.0
        %798 = vmatprep.subr.mxu0 0.0
        %799 = vmatpush1.msra.mxu0 0.0
        %800 = vmatprep.subr.mxu0 0.0
        %801 = vmatpush1.msra.mxu0 0.0
        %802 = vmatprep.subr.mxu0 0.0
        %803 = vmatpush1.msra.mxu0 0.0
        %804 = vmatprep.subr.mxu0 0.0
        %805 = vmatpush1.msra.mxu0 0.0
        %806 = vmatprep.subr.mxu0 0.0
        %807 = vmatpush1.msra.mxu0 0.0
        %808 = vmatprep.subr.mxu0 0.0
        %809 = vmatpush1.msra.mxu0 0.0
        %810 = vmatprep.subr.mxu0 0.0
        %811 = vmatpush1.msra.mxu0 0.0
        %812 = vmatprep.mubr.f32.mxu0 0.0
        %813 = vmatmul.mubr.f32.gmra.mrb[0].mxu0 %v667
        %v814 = vpop.f32.mrb[0].mxu0
        %v815 = vadd.f32 0.0, %v814
        %v816 = vpop.f32.mrb[0].mxu0
        %v817 = vadd.f32 0.0, %v816
        %818 = vdwg.mxu0
        %819 = vmatprep.subr.mxu0 %v671
        %820 = vmatpush1.msra.mxu0 %v670
        %821 = vmatprep.subr.mxu0 %v676
        %822 = vmatpush1.msra.mxu0 %v675
        %823 = vmatprep.subr.mxu0 %v681
        %824 = vmatpush1.msra.mxu0 %v680
        %825 = vmatprep.subr.mxu0 %v686
        %826 = vmatpush1.msra.mxu0 %v685
        %827 = vmatprep.subr.mxu0 %v691
        %828 = vmatpush1.msra.mxu0 %v690
        %829 = vmatprep.subr.mxu0 %v696
        %830 = vmatpush1.msra.mxu0 %v695
        %831 = vmatprep.subr.mxu0 %v701
        %832 = vmatpush1.msra.mxu0 %v700
        %833 = vmatprep.subr.mxu0 %v706
        %834 = vmatpush1.msra.mxu0 %v705
        %835 = vmatprep.subr.mxu0 %v711
        %836 = vmatpush1.msra.mxu0 %v710
        %837 = vmatprep.subr.mxu0 %v716
        %838 = vmatpush1.msra.mxu0 %v715
        %839 = vmatprep.subr.mxu0 %v721
        %840 = vmatpush1.msra.mxu0 %v720
        %841 = vmatprep.subr.mxu0 %v726
        %842 = vmatpush1.msra.mxu0 %v725
        %843 = vmatprep.subr.mxu0 %v731
        %844 = vmatpush1.msra.mxu0 %v730
        %845 = vmatprep.subr.mxu0 %v736
        %846 = vmatpush1.msra.mxu0 %v735
        %847 = vmatprep.subr.mxu0 %v741
        %848 = vmatpush1.msra.mxu0 %v740
        %849 = vmatprep.subr.mxu0 %v746
        %850 = vmatpush1.msra.mxu0 %v745
        %851 = vmatprep.subr.mxu0 0.0
        %852 = vmatpush1.msra.mxu0 0.0
        %853 = vmatprep.subr.mxu0 0.0
        %854 = vmatpush1.msra.mxu0 0.0
        %855 = vmatprep.subr.mxu0 0.0
        %856 = vmatpush1.msra.mxu0 0.0
        %857 = vmatprep.subr.mxu0 0.0
        %858 = vmatpush1.msra.mxu0 0.0
        %859 = vmatprep.subr.mxu0 0.0
        %860 = vmatpush1.msra.mxu0 0.0
        %861 = vmatprep.subr.mxu0 0.0
        %862 = vmatpush1.msra.mxu0 0.0
        %863 = vmatprep.subr.mxu0 0.0
        %864 = vmatpush1.msra.mxu0 0.0
        %865 = vmatprep.subr.mxu0 0.0
        %866 = vmatpush1.msra.mxu0 0.0
        %867 = vmatprep.subr.mxu0 0.0
        %868 = vmatpush1.msra.mxu0 0.0
        %869 = vmatprep.subr.mxu0 0.0
        %870 = vmatpush1.msra.mxu0 0.0
        %871 = vmatprep.subr.mxu0 0.0
        %872 = vmatpush1.msra.mxu0 0.0
        %873 = vmatprep.subr.mxu0 0.0
        %874 = vmatpush1.msra.mxu0 0.0
        %875 = vmatprep.subr.mxu0 0.0
        %876 = vmatpush1.msra.mxu0 0.0
        %877 = vmatprep.subr.mxu0 0.0
        %878 = vmatpush1.msra.mxu0 0.0
        %879 = vmatprep.subr.mxu0 0.0
        %880 = vmatpush1.msra.mxu0 0.0
        %881 = vmatprep.subr.mxu0 0.0
        %882 = vmatpush1.msra.mxu0 0.0
        %883 = vmatprep.mubr.f32.mxu0 0.0
        %884 = vmatmul.mubr.f32.gmra.mrb[0].mxu0 %v667
        %v885 = vpop.f32.mrb[0].mxu0
        %v886 = vadd.f32 0.0, %v885
        %v887 = vpop.f32.mrb[0].mxu0
        %v888 = vadd.f32 0.0, %v887
        %889 = vdwg.mxu0
        %890 = vmatprep.subr.mxu0 0.0
        %891 = vmatpush1.msra.mxu0 %v672
        %892 = vmatprep.subr.mxu0 0.0
        %893 = vmatpush1.msra.mxu0 %v677
        %894 = vmatprep.subr.mxu0 0.0
        %895 = vmatpush1.msra.mxu0 %v682
        %896 = vmatprep.subr.mxu0 0.0
        %897 = vmatpush1.msra.mxu0 %v687
        %898 = vmatprep.subr.mxu0 0.0
        %899 = vmatpush1.msra.mxu0 %v692
        %900 = vmatprep.subr.mxu0 0.0
        %901 = vmatpush1.msra.mxu0 %v697
        %902 = vmatprep.subr.mxu0 0.0
        %903 = vmatpush1.msra.mxu0 %v702
        %904 = vmatprep.subr.mxu0 0.0
        %905 = vmatpush1.msra.mxu0 %v707
        %906 = vmatprep.subr.mxu0 0.0
        %907 = vmatpush1.msra.mxu0 %v712
        %908 = vmatprep.subr.mxu0 0.0
        %909 = vmatpush1.msra.mxu0 %v717
        %910 = vmatprep.subr.mxu0 0.0
        %911 = vmatpush1.msra.mxu0 %v722
        %912 = vmatprep.subr.mxu0 0.0
        %913 = vmatpush1.msra.mxu0 %v727
        %914 = vmatprep.subr.mxu0 0.0
        %915 = vmatpush1.msra.mxu0 %v732
        %916 = vmatprep.subr.mxu0 0.0
        %917 = vmatpush1.msra.mxu0 %v737
        %918 = vmatprep.subr.mxu0 0.0
        %919 = vmatpush1.msra.mxu0 %v742
        %920 = vmatprep.subr.mxu0 0.0
        %921 = vmatpush1.msra.mxu0 %v747
        %922 = vmatprep.subr.mxu0 0.0
        %923 = vmatpush1.msra.mxu0 0.0
        %924 = vmatprep.subr.mxu0 0.0
        %925 = vmatpush1.msra.mxu0 0.0
        %926 = vmatprep.subr.mxu0 0.0
        %927 = vmatpush1.msra.mxu0 0.0
        %928 = vmatprep.subr.mxu0 0.0
        %929 = vmatpush1.msra.mxu0 0.0
        %930 = vmatprep.subr.mxu0 0.0
        %931 = vmatpush1.msra.mxu0 0.0
        %932 = vmatprep.subr.mxu0 0.0
        %933 = vmatpush1.msra.mxu0 0.0
        %934 = vmatprep.subr.mxu0 0.0
        %935 = vmatpush1.msra.mxu0 0.0
        %936 = vmatprep.subr.mxu0 0.0
        %937 = vmatpush1.msra.mxu0 0.0
        %938 = vmatprep.subr.mxu0 0.0
        %939 = vmatpush1.msra.mxu0 0.0
        %940 = vmatprep.subr.mxu0 0.0
        %941 = vmatpush1.msra.mxu0 0.0
        %942 = vmatprep.subr.mxu0 0.0
        %943 = vmatpush1.msra.mxu0 0.0
        %944 = vmatprep.subr.mxu0 0.0
        %945 = vmatpush1.msra.mxu0 0.0
        %946 = vmatprep.subr.mxu0 0.0
        %947 = vmatpush1.msra.mxu0 0.0
        %948 = vmatprep.subr.mxu0 0.0
        %949 = vmatpush1.msra.mxu0 0.0
        %950 = vmatprep.subr.mxu0 0.0
        %951 = vmatpush1.msra.mxu0 0.0
        %952 = vmatprep.subr.mxu0 0.0
        %953 = vmatpush1.msra.mxu0 0.0
        %954 = vmatprep.mubr.f32.mxu0 0.0
        %955 = vmatmul.mubr.f32.gmra.mrb[0].mxu0 %v667
        %v956 = vpop.f32.mrb[0].mxu0
        %v957 = vadd.f32 0.0, %v956
        %v958 = vpop.f32.mrb[0].mxu0
        %959 = vdwg.mxu0
        %v960 = vld [vmem:[%s8] sm:$0x1]
        %v962 = vlaneseq
        %v963 = vshrl.u32 %v962, 7
        %v964 = vsub.s32 0, %v963
        %v965 = vrot.slane %v960, %v964
        %v967 = vadd.f32 %v957, %v965
        %968 = vmax.xlane.f32.xlu0 %v815
        %v969 = vpop.xlane.xlu0 %968
        %vm970 = vcmp.eq.f32.partialorder %v815, %v969
        %v971 = vsel %vm970, -1e+30, %v815
        %972 = vmax.xlane.f32.xlu0 %v971
        %v973 = vpop.xlane.xlu0 %972
        %vm974 = vcmp.eq.f32.partialorder %v971, %v973
        %v975 = vsel %vm974, -1e+30, %v971
        %976 = vmax.xlane.f32.xlu0 %v975
        %v977 = vpop.xlane.xlu0 %976
        %vm978 = vcmp.eq.f32.partialorder %v975, %v977
        %v979 = vsel %vm978, -1e+30, %v975
        %980 = vmax.xlane.f32.xlu0 %v979
        %v981 = vpop.xlane.xlu0 %980
        %vm982 = vcmp.eq.f32.partialorder %v979, %v981
        %v983 = vsel %vm982, -1e+30, %v979
        %984 = vmax.xlane.f32.xlu0 %v983
        %v985 = vpop.xlane.xlu0 %984
        %vm986 = vcmp.eq.f32.partialorder %v983, %v985
        %v987 = vsel %vm986, -1e+30, %v983
        %988 = vmax.xlane.f32.xlu0 %v987
        %v989 = vpop.xlane.xlu0 %988
        %vm990 = vcmp.eq.f32.partialorder %v987, %v989
        %v991 = vsel %vm990, -1e+30, %v987
        %992 = vmax.xlane.f32.xlu0 %v991
        %v993 = vpop.xlane.xlu0 %992
        %vm994 = vcmp.eq.f32.partialorder %v991, %v993
        %v995 = vsel %vm994, -1e+30, %v991
        %996 = vmax.xlane.f32.xlu0 %v995
        %v997 = vpop.xlane.xlu0 %996
        %vm998 = vcmp.eq.f32.partialorder %v995, %v997
        %v999 = vsel %vm998, -1e+30, %v995
        %vm1000 = vcmp.eq.f32.partialorder %v999, -1e+30
        %v1001 = vsub.f32 %v815, %v969
        %v1002 = vmul.f32 %v1001, 1.442695
        %v1003 = vpow.pop %v1002
        %v1004 = vsel %vm1000, %v1003, 0.0
        %1005 = vadd.xlane.f32.xlu0 %v1004
        %v1006 = vpop.xlane.xlu0 %1005
        %v1007 = vrcp.pop %v1006
        %v1008 = vmul.f32 %v1004, %v1007
        %v1009 = vld [vmem:[#allocation10] sm:$0xff]
        %v1010 = vld [vmem:[#allocation10 + $0x8] sm:$0xff]
        %v1011 = vld [vmem:[#allocation10 + $0x10] sm:$0xff]
        %v1012 = vld [vmem:[#allocation10 + $0x18] sm:$0xff]
        %v1013 = vld [vmem:[#allocation10 + $0x20] sm:$0xff]
        %v1014 = vld [vmem:[#allocation10 + $0x28] sm:$0xff]
        %v1015 = vld [vmem:[#allocation10 + $0x30] sm:$0xff]
        %v1016 = vld [vmem:[#allocation10 + $0x38] sm:$0xff]
        %v1017 = vld [vmem:[#allocation10 + $0x40] sm:$0xff]
        %v1018 = vld [vmem:[#allocation10 + $0x48] sm:$0xff]
        %v1019 = vld [vmem:[#allocation10 + $0x50] sm:$0xff]
        %v1020 = vld [vmem:[#allocation10 + $0x58] sm:$0xff]
        %v1021 = vld [vmem:[#allocation10 + $0x60] sm:$0xff]
        %v1022 = vld [vmem:[#allocation10 + $0x68] sm:$0xff]
        %v1023 = vld [vmem:[#allocation10 + $0x70] sm:$0xff]
        %v1024 = vld [vmem:[#allocation10 + $0x78] sm:$0xff]
        %1025 = vmatprep.subr.mxu0 0.0
        %1026 = vmatpush1.msra.mxu0 %v1009
        %1027 = vmatprep.subr.mxu0 0.0
        %1028 = vmatpush1.msra.mxu0 %v1010
        %1029 = vmatprep.subr.mxu0 0.0
        %1030 = vmatpush1.msra.mxu0 %v1011
        %1031 = vmatprep.subr.mxu0 0.0
        %1032 = vmatpush1.msra.mxu0 %v1012
        %1033 = vmatprep.subr.mxu0 0.0
        %1034 = vmatpush1.msra.mxu0 %v1013
        %1035 = vmatprep.subr.mxu0 0.0
        %1036 = vmatpush1.msra.mxu0 %v1014
        %1037 = vmatprep.subr.mxu0 0.0
        %1038 = vmatpush1.msra.mxu0 %v1015
        %1039 = vmatprep.subr.mxu0 0.0
        %1040 = vmatpush1.msra.mxu0 %v1016
        %1041 = vmatprep.subr.mxu0 0.0
        %1042 = vmatpush1.msra.mxu0 %v1017
        %1043 = vmatprep.subr.mxu0 0.0
        %1044 = vmatpush1.msra.mxu0 %v1018
        %1045 = vmatprep.subr.mxu0 0.0
        %1046 = vmatpush1.msra.mxu0 %v1019
        %1047 = vmatprep.subr.mxu0 0.0
        %1048 = vmatpush1.msra.mxu0 %v1020
        %1049 = vmatprep.subr.mxu0 0.0
        %1050 = vmatpush1.msra.mxu0 %v1021
        %1051 = vmatprep.subr.mxu0 0.0
        %1052 = vmatpush1.msra.mxu0 %v1022
        %1053 = vmatprep.subr.mxu0 0.0
        %1054 = vmatpush1.msra.mxu0 %v1023
        %1055 = vmatprep.subr.mxu0 0.0
        %1056 = vmatpush1.msra.mxu0 %v1024
        %1057 = vmatprep.subr.mxu0 0.0
        %1058 = vmatpush1.msra.mxu0 0.0
        %1059 = vmatprep.subr.mxu0 0.0
        %1060 = vmatpush1.msra.mxu0 0.0
        %1061 = vmatprep.subr.mxu0 0.0
        %1062 = vmatpush1.msra.mxu0 0.0
        %1063 = vmatprep.subr.mxu0 0.0
        %1064 = vmatpush1.msra.mxu0 0.0
        %1065 = vmatprep.subr.mxu0 0.0
        %1066 = vmatpush1.msra.mxu0 0.0
        %1067 = vmatprep.subr.mxu0 0.0
        %1068 = vmatpush1.msra.mxu0 0.0
        %1069 = vmatprep.subr.mxu0 0.0
        %1070 = vmatpush1.msra.mxu0 0.0
        %1071 = vmatprep.subr.mxu0 0.0
        %1072 = vmatpush1.msra.mxu0 0.0
        %1073 = vmatprep.subr.mxu0 0.0
        %1074 = vmatpush1.msra.mxu0 0.0
        %1075 = vmatprep.subr.mxu0 0.0
        %1076 = vmatpush1.msra.mxu0 0.0
        %1077 = vmatprep.subr.mxu0 0.0
        %1078 = vmatpush1.msra.mxu0 0.0
        %1079 = vmatprep.subr.mxu0 0.0
        %1080 = vmatpush1.msra.mxu0 0.0
        %1081 = vmatprep.subr.mxu0 0.0
        %1082 = vmatpush1.msra.mxu0 0.0
        %1083 = vmatprep.subr.mxu0 0.0
        %1084 = vmatpush1.msra.mxu0 0.0
        %1085 = vmatprep.subr.mxu0 0.0
        %1086 = vmatpush1.msra.mxu0 0.0
        %1087 = vmatprep.subr.mxu0 0.0
        %1088 = vmatpush1.msra.mxu0 0.0
        %1089 = vmatprep.mubr.f32.mxu0 0.0
        %1090 = vmatmul.mubr.f32.gmra.mrb[0].mxu0 %v1008
        %v1091 = vpop.f32.mrb[0].mxu0
        %v1092 = vadd.f32 0.0, %v1091
        %v1093 = vpop.f32.mrb[0].mxu0
        %1094 = vdwg.mxu0
        %v1095 = vadd.f32 %v967, %v1092
        %1096 = vmax.xlane.f32.xlu0 %v817
        %v1097 = vpop.xlane.xlu0 %1096
        %vm1098 = vcmp.eq.f32.partialorder %v817, %v1097
        %v1099 = vsel %vm1098, -1e+30, %v817
        %1100 = vmax.xlane.f32.xlu0 %v1099
        %v1101 = vpop.xlane.xlu0 %1100
        %vm1102 = vcmp.eq.f32.partialorder %v1099, %v1101
        %v1103 = vsel %vm1102, -1e+30, %v1099
        %1104 = vmax.xlane.f32.xlu0 %v1103
        %v1105 = vpop.xlane.xlu0 %1104
        %vm1106 = vcmp.eq.f32.partialorder %v1103, %v1105
        %v1107 = vsel %vm1106, -1e+30, %v1103
        %1108 = vmax.xlane.f32.xlu0 %v1107
        %v1109 = vpop.xlane.xlu0 %1108
        %vm1110 = vcmp.eq.f32.partialorder %v1107, %v1109
        %v1111 = vsel %vm1110, -1e+30, %v1107
        %1112 = vmax.xlane.f32.xlu0 %v1111
        %v1113 = vpop.xlane.xlu0 %1112
        %vm1114 = vcmp.eq.f32.partialorder %v1111, %v1113
        %v1115 = vsel %vm1114, -1e+30, %v1111
        %1116 = vmax.xlane.f32.xlu0 %v1115
        %v1117 = vpop.xlane.xlu0 %1116
        %vm1118 = vcmp.eq.f32.partialorder %v1115, %v1117
        %v1119 = vsel %vm1118, -1e+30, %v1115
        %1120 = vmax.xlane.f32.xlu0 %v1119
        %v1121 = vpop.xlane.xlu0 %1120
        %vm1122 = vcmp.eq.f32.partialorder %v1119, %v1121
        %v1123 = vsel %vm1122, -1e+30, %v1119
        %1124 = vmax.xlane.f32.xlu0 %v1123
        %v1125 = vpop.xlane.xlu0 %1124
        %vm1126 = vcmp.eq.f32.partialorder %v1123, %v1125
        %v1127 = vsel %vm1126, -1e+30, %v1123
        %vm1128 = vcmp.eq.f32.partialorder %v1127, -1e+30
        %v1129 = vsub.f32 %v817, %v1097
        %v1130 = vmul.f32 %v1129, 1.442695
        %v1131 = vpow.pop %v1130
        %v1132 = vsel %vm1128, %v1131, 0.0
        %1133 = vadd.xlane.f32.xlu0 %v1132
        %v1134 = vpop.xlane.xlu0 %1133
        %v1135 = vrcp.pop %v1134
        %v1136 = vmul.f32 %v1132, %v1135
        %v1137 = vld [vmem:[#allocation10 + $0x80] sm:$0xff]
        %v1138 = vld [vmem:[#allocation10 + $0x88] sm:$0xff]
        %v1139 = vld [vmem:[#allocation10 + $0x90] sm:$0xff]
        %v1140 = vld [vmem:[#allocation10 + $0x98] sm:$0xff]
        %v1141 = vld [vmem:[#allocation10 + $0xa0] sm:$0xff]
        %v1142 = vld [vmem:[#allocation10 + $0xa8] sm:$0xff]
        %v1143 = vld [vmem:[#allocation10 + $0xb0] sm:$0xff]
        %v1144 = vld [vmem:[#allocation10 + $0xb8] sm:$0xff]
        %v1145 = vld [vmem:[#allocation10 + $0xc0] sm:$0xff]
        %v1146 = vld [vmem:[#allocation10 + $0xc8] sm:$0xff]
        %v1147 = vld [vmem:[#allocation10 + $0xd0] sm:$0xff]
        %v1148 = vld [vmem:[#allocation10 + $0xd8] sm:$0xff]
        %v1149 = vld [vmem:[#allocation10 + $0xe0] sm:$0xff]
        %v1150 = vld [vmem:[#allocation10 + $0xe8] sm:$0xff]
        %v1151 = vld [vmem:[#allocation10 + $0xf0] sm:$0xff]
        %v1152 = vld [vmem:[#allocation10 + $0xf8] sm:$0xff]
        %1153 = vmatprep.subr.mxu0 0.0
        %1154 = vmatpush1.msra.mxu0 %v1137
        %1155 = vmatprep.subr.mxu0 0.0
        %1156 = vmatpush1.msra.mxu0 %v1138
        %1157 = vmatprep.subr.mxu0 0.0
        %1158 = vmatpush1.msra.mxu0 %v1139
        %1159 = vmatprep.subr.mxu0 0.0
        %1160 = vmatpush1.msra.mxu0 %v1140
        %1161 = vmatprep.subr.mxu0 0.0
        %1162 = vmatpush1.msra.mxu0 %v1141
        %1163 = vmatprep.subr.mxu0 0.0
        %1164 = vmatpush1.msra.mxu0 %v1142
        %1165 = vmatprep.subr.mxu0 0.0
        %1166 = vmatpush1.msra.mxu0 %v1143
        %1167 = vmatprep.subr.mxu0 0.0
        %1168 = vmatpush1.msra.mxu0 %v1144
        %1169 = vmatprep.subr.mxu0 0.0
        %1170 = vmatpush1.msra.mxu0 %v1145
        %1171 = vmatprep.subr.mxu0 0.0
        %1172 = vmatpush1.msra.mxu0 %v1146
        %1173 = vmatprep.subr.mxu0 0.0
        %1174 = vmatpush1.msra.mxu0 %v1147
        %1175 = vmatprep.subr.mxu0 0.0
        %1176 = vmatpush1.msra.mxu0 %v1148
        %1177 = vmatprep.subr.mxu0 0.0
        %1178 = vmatpush1.msra.mxu0 %v1149
        %1179 = vmatprep.subr.mxu0 0.0
        %1180 = vmatpush1.msra.mxu0 %v1150
        %1181 = vmatprep.subr.mxu0 0.0
        %1182 = vmatpush1.msra.mxu0 %v1151
        %1183 = vmatprep.subr.mxu0 0.0
        %1184 = vmatpush1.msra.mxu0 %v1152
        %1185 = vmatprep.subr.mxu0 0.0
        %1186 = vmatpush1.msra.mxu0 0.0
        %1187 = vmatprep.subr.mxu0 0.0
        %1188 = vmatpush1.msra.mxu0 0.0
        %1189 = vmatprep.subr.mxu0 0.0
        %1190 = vmatpush1.msra.mxu0 0.0
        %1191 = vmatprep.subr.mxu0 0.0
        %1192 = vmatpush1.msra.mxu0 0.0
        %1193 = vmatprep.subr.mxu0 0.0
        %1194 = vmatpush1.msra.mxu0 0.0
        %1195 = vmatprep.subr.mxu0 0.0
        %1196 = vmatpush1.msra.mxu0 0.0
        %1197 = vmatprep.subr.mxu0 0.0
        %1198 = vmatpush1.msra.mxu0 0.0
        %1199 = vmatprep.subr.mxu0 0.0
        %1200 = vmatpush1.msra.mxu0 0.0
        %1201 = vmatprep.subr.mxu0 0.0
        %1202 = vmatpush1.msra.mxu0 0.0
        %1203 = vmatprep.subr.mxu0 0.0
        %1204 = vmatpush1.msra.mxu0 0.0
        %1205 = vmatprep.subr.mxu0 0.0
        %1206 = vmatpush1.msra.mxu0 0.0
        %1207 = vmatprep.subr.mxu0 0.0
        %1208 = vmatpush1.msra.mxu0 0.0
        %1209 = vmatprep.subr.mxu0 0.0
        %1210 = vmatpush1.msra.mxu0 0.0
        %1211 = vmatprep.subr.mxu0 0.0
        %1212 = vmatpush1.msra.mxu0 0.0
        %1213 = vmatprep.subr.mxu0 0.0
        %1214 = vmatpush1.msra.mxu0 0.0
        %1215 = vmatprep.subr.mxu0 0.0
        %1216 = vmatpush1.msra.mxu0 0.0
        %1217 = vmatprep.mubr.f32.mxu0 0.0
        %1218 = vmatmul.mubr.f32.gmra.mrb[0].mxu0 %v1136
        %v1219 = vpop.f32.mrb[0].mxu0
        %v1220 = vadd.f32 0.0, %v1219
        %v1221 = vpop.f32.mrb[0].mxu0
        %1222 = vdwg.mxu0
        %v1223 = vadd.f32 %v1095, %v1220
        %1224 = vmax.xlane.f32.xlu0 %v886
        %v1225 = vpop.xlane.xlu0 %1224
        %vm1226 = vcmp.eq.f32.partialorder %v886, %v1225
        %v1227 = vsel %vm1226, -1e+30, %v886
        %1228 = vmax.xlane.f32.xlu0 %v1227
        %v1229 = vpop.xlane.xlu0 %1228
        %vm1230 = vcmp.eq.f32.partialorder %v1227, %v1229
        %v1231 = vsel %vm1230, -1e+30, %v1227
        %1232 = vmax.xlane.f32.xlu0 %v1231
        %v1233 = vpop.xlane.xlu0 %1232
        %vm1234 = vcmp.eq.f32.partialorder %v1231, %v1233
        %v1235 = vsel %vm1234, -1e+30, %v1231
        %1236 = vmax.xlane.f32.xlu0 %v1235
        %v1237 = vpop.xlane.xlu0 %1236
        %vm1238 = vcmp.eq.f32.partialorder %v1235, %v1237
        %v1239 = vsel %vm1238, -1e+30, %v1235
        %1240 = vmax.xlane.f32.xlu0 %v1239
        %v1241 = vpop.xlane.xlu0 %1240
        %vm1242 = vcmp.eq.f32.partialorder %v1239, %v1241
        %v1243 = vsel %vm1242, -1e+30, %v1239
        %1244 = vmax.xlane.f32.xlu0 %v1243
        %v1245 = vpop.xlane.xlu0 %1244
        %vm1246 = vcmp.eq.f32.partialorder %v1243, %v1245
        %v1247 = vsel %vm1246, -1e+30, %v1243
        %1248 = vmax.xlane.f32.xlu0 %v1247
        %v1249 = vpop.xlane.xlu0 %1248
        %vm1250 = vcmp.eq.f32.partialorder %v1247, %v1249
        %v1251 = vsel %vm1250, -1e+30, %v1247
        %1252 = vmax.xlane.f32.xlu0 %v1251
        %v1253 = vpop.xlane.xlu0 %1252
        %vm1254 = vcmp.eq.f32.partialorder %v1251, %v1253
        %v1255 = vsel %vm1254, -1e+30, %v1251
        %vm1256 = vcmp.eq.f32.partialorder %v1255, -1e+30
        %v1257 = vsub.f32 %v886, %v1225
        %v1258 = vmul.f32 %v1257, 1.442695
        %v1259 = vpow.pop %v1258
        %v1260 = vsel %vm1256, %v1259, 0.0
        %1261 = vadd.xlane.f32.xlu0 %v1260
        %v1262 = vpop.xlane.xlu0 %1261
        %v1263 = vrcp.pop %v1262
        %v1264 = vmul.f32 %v1260, %v1263
        %v1265 = vld [vmem:[#allocation10 + $0x100] sm:$0xff]
        %v1266 = vld [vmem:[#allocation10 + $0x108] sm:$0xff]
        %v1267 = vld [vmem:[#allocation10 + $0x110] sm:$0xff]
        %v1268 = vld [vmem:[#allocation10 + $0x118] sm:$0xff]
        %v1269 = vld [vmem:[#allocation10 + $0x120] sm:$0xff]
        %v1270 = vld [vmem:[#allocation10 + $0x128] sm:$0xff]
        %v1271 = vld [vmem:[#allocation10 + $0x130] sm:$0xff]
        %v1272 = vld [vmem:[#allocation10 + $0x138] sm:$0xff]
        %v1273 = vld [vmem:[#allocation10 + $0x140] sm:$0xff]
        %v1274 = vld [vmem:[#allocation10 + $0x148] sm:$0xff]
        %v1275 = vld [vmem:[#allocation10 + $0x150] sm:$0xff]
        %v1276 = vld [vmem:[#allocation10 + $0x158] sm:$0xff]
        %v1277 = vld [vmem:[#allocation10 + $0x160] sm:$0xff]
        %v1278 = vld [vmem:[#allocation10 + $0x168] sm:$0xff]
        %v1279 = vld [vmem:[#allocation10 + $0x170] sm:$0xff]
        %v1280 = vld [vmem:[#allocation10 + $0x178] sm:$0xff]
        %1281 = vmatprep.subr.mxu0 0.0
        %1282 = vmatpush1.msra.mxu0 %v1265
        %1283 = vmatprep.subr.mxu0 0.0
        %1284 = vmatpush1.msra.mxu0 %v1266
        %1285 = vmatprep.subr.mxu0 0.0
        %1286 = vmatpush1.msra.mxu0 %v1267
        %1287 = vmatprep.subr.mxu0 0.0
        %1288 = vmatpush1.msra.mxu0 %v1268
        %1289 = vmatprep.subr.mxu0 0.0
        %1290 = vmatpush1.msra.mxu0 %v1269
        %1291 = vmatprep.subr.mxu0 0.0
        %1292 = vmatpush1.msra.mxu0 %v1270
        %1293 = vmatprep.subr.mxu0 0.0
        %1294 = vmatpush1.msra.mxu0 %v1271
        %1295 = vmatprep.subr.mxu0 0.0
        %1296 = vmatpush1.msra.mxu0 %v1272
        %1297 = vmatprep.subr.mxu0 0.0
        %1298 = vmatpush1.msra.mxu0 %v1273
        %1299 = vmatprep.subr.mxu0 0.0
        %1300 = vmatpush1.msra.mxu0 %v1274
        %1301 = vmatprep.subr.mxu0 0.0
        %1302 = vmatpush1.msra.mxu0 %v1275
        %1303 = vmatprep.subr.mxu0 0.0
        %1304 = vmatpush1.msra.mxu0 %v1276
        %1305 = vmatprep.subr.mxu0 0.0
        %1306 = vmatpush1.msra.mxu0 %v1277
        %1307 = vmatprep.subr.mxu0 0.0
        %1308 = vmatpush1.msra.mxu0 %v1278
        %1309 = vmatprep.subr.mxu0 0.0
        %1310 = vmatpush1.msra.mxu0 %v1279
        %1311 = vmatprep.subr.mxu0 0.0
        %1312 = vmatpush1.msra.mxu0 %v1280
        %1313 = vmatprep.subr.mxu0 0.0
        %1314 = vmatpush1.msra.mxu0 0.0
        %1315 = vmatprep.subr.mxu0 0.0
        %1316 = vmatpush1.msra.mxu0 0.0
        %1317 = vmatprep.subr.mxu0 0.0
        %1318 = vmatpush1.msra.mxu0 0.0
        %1319 = vmatprep.subr.mxu0 0.0
        %1320 = vmatpush1.msra.mxu0 0.0
        %1321 = vmatprep.subr.mxu0 0.0
        %1322 = vmatpush1.msra.mxu0 0.0
        %1323 = vmatprep.subr.mxu0 0.0
        %1324 = vmatpush1.msra.mxu0 0.0
        %1325 = vmatprep.subr.mxu0 0.0
        %1326 = vmatpush1.msra.mxu0 0.0
        %1327 = vmatprep.subr.mxu0 0.0
        %1328 = vmatpush1.msra.mxu0 0.0
        %1329 = vmatprep.subr.mxu0 0.0
        %1330 = vmatpush1.msra.mxu0 0.0
        %1331 = vmatprep.subr.mxu0 0.0
        %1332 = vmatpush1.msra.mxu0 0.0
        %1333 = vmatprep.subr.mxu0 0.0
        %1334 = vmatpush1.msra.mxu0 0.0
        %1335 = vmatprep.subr.mxu0 0.0
        %1336 = vmatpush1.msra.mxu0 0.0
        %1337 = vmatprep.subr.mxu0 0.0
        %1338 = vmatpush1.msra.mxu0 0.0
        %1339 = vmatprep.subr.mxu0 0.0
        %1340 = vmatpush1.msra.mxu0 0.0
        %1341 = vmatprep.subr.mxu0 0.0
        %1342 = vmatpush1.msra.mxu0 0.0
        %1343 = vmatprep.subr.mxu0 0.0
        %1344 = vmatpush1.msra.mxu0 0.0
        %1345 = vmatprep.mubr.f32.mxu0 0.0
        %1346 = vmatmul.mubr.f32.gmra.mrb[0].mxu0 %v1264
        %v1347 = vpop.f32.mrb[0].mxu0
        %v1348 = vadd.f32 0.0, %v1347
        %v1349 = vpop.f32.mrb[0].mxu0
        %1350 = vdwg.mxu0
        %v1351 = vadd.f32 %v1223, %v1348
        %1352 = vmax.xlane.f32.xlu0 %v888
        %v1353 = vpop.xlane.xlu0 %1352
        %vm1354 = vcmp.eq.f32.partialorder %v888, %v1353
        %v1355 = vsel %vm1354, -1e+30, %v888
        %1356 = vmax.xlane.f32.xlu0 %v1355
        %v1357 = vpop.xlane.xlu0 %1356
        %vm1358 = vcmp.eq.f32.partialorder %v1355, %v1357
        %v1359 = vsel %vm1358, -1e+30, %v1355
        %1360 = vmax.xlane.f32.xlu0 %v1359
        %v1361 = vpop.xlane.xlu0 %1360
        %vm1362 = vcmp.eq.f32.partialorder %v1359, %v1361
        %v1363 = vsel %vm1362, -1e+30, %v1359
        %1364 = vmax.xlane.f32.xlu0 %v1363
        %v1365 = vpop.xlane.xlu0 %1364
        %vm1366 = vcmp.eq.f32.partialorder %v1363, %v1365
        %v1367 = vsel %vm1366, -1e+30, %v1363
        %1368 = vmax.xlane.f32.xlu0 %v1367
        %v1369 = vpop.xlane.xlu0 %1368
        %vm1370 = vcmp.eq.f32.partialorder %v1367, %v1369
        %v1371 = vsel %vm1370, -1e+30, %v1367
        %1372 = vmax.xlane.f32.xlu0 %v1371
        %v1373 = vpop.xlane.xlu0 %1372
        %vm1374 = vcmp.eq.f32.partialorder %v1371, %v1373
        %v1375 = vsel %vm1374, -1e+30, %v1371
        %1376 = vmax.xlane.f32.xlu0 %v1375
        %v1377 = vpop.xlane.xlu0 %1376
        %vm1378 = vcmp.eq.f32.partialorder %v1375, %v1377
        %v1379 = vsel %vm1378, -1e+30, %v1375
        %1380 = vmax.xlane.f32.xlu0 %v1379
        %v1381 = vpop.xlane.xlu0 %1380
        %vm1382 = vcmp.eq.f32.partialorder %v1379, %v1381
        %v1383 = vsel %vm1382, -1e+30, %v1379
        %vm1384 = vcmp.eq.f32.partialorder %v1383, -1e+30
        %v1385 = vsub.f32 %v888, %v1353
        %v1386 = vmul.f32 %v1385, 1.442695
        %v1387 = vpow.pop %v1386
        %v1388 = vsel %vm1384, %v1387, 0.0
        %1389 = vadd.xlane.f32.xlu0 %v1388
        %v1390 = vpop.xlane.xlu0 %1389
        %v1391 = vrcp.pop %v1390
        %v1392 = vmul.f32 %v1388, %v1391
        %v1393 = vld [vmem:[#allocation10 + $0x180] sm:$0xff]
        %v1394 = vld [vmem:[#allocation10 + $0x188] sm:$0xff]
        %v1395 = vld [vmem:[#allocation10 + $0x190] sm:$0xff]
        %v1396 = vld [vmem:[#allocation10 + $0x198] sm:$0xff]
        %v1397 = vld [vmem:[#allocation10 + $0x1a0] sm:$0xff]
        %v1398 = vld [vmem:[#allocation10 + $0x1a8] sm:$0xff]
        %v1399 = vld [vmem:[#allocation10 + $0x1b0] sm:$0xff]
        %v1400 = vld [vmem:[#allocation10 + $0x1b8] sm:$0xff]
        %v1401 = vld [vmem:[#allocation10 + $0x1c0] sm:$0xff]
        %v1402 = vld [vmem:[#allocation10 + $0x1c8] sm:$0xff]
        %v1403 = vld [vmem:[#allocation10 + $0x1d0] sm:$0xff]
        %v1404 = vld [vmem:[#allocation10 + $0x1d8] sm:$0xff]
        %v1405 = vld [vmem:[#allocation10 + $0x1e0] sm:$0xff]
        %v1406 = vld [vmem:[#allocation10 + $0x1e8] sm:$0xff]
        %v1407 = vld [vmem:[#allocation10 + $0x1f0] sm:$0xff]
        %v1408 = vld [vmem:[#allocation10 + $0x1f8] sm:$0xff]
        %1409 = vmatprep.subr.mxu0 0.0
        %1410 = vmatpush1.msra.mxu0 %v1393
        %1411 = vmatprep.subr.mxu0 0.0
        %1412 = vmatpush1.msra.mxu0 %v1394
        %1413 = vmatprep.subr.mxu0 0.0
        %1414 = vmatpush1.msra.mxu0 %v1395
        %1415 = vmatprep.subr.mxu0 0.0
        %1416 = vmatpush1.msra.mxu0 %v1396
        %1417 = vmatprep.subr.mxu0 0.0
        %1418 = vmatpush1.msra.mxu0 %v1397
        %1419 = vmatprep.subr.mxu0 0.0
        %1420 = vmatpush1.msra.mxu0 %v1398
        %1421 = vmatprep.subr.mxu0 0.0
        %1422 = vmatpush1.msra.mxu0 %v1399
        %1423 = vmatprep.subr.mxu0 0.0
        %1424 = vmatpush1.msra.mxu0 %v1400
        %1425 = vmatprep.subr.mxu0 0.0
        %1426 = vmatpush1.msra.mxu0 %v1401
        %1427 = vmatprep.subr.mxu0 0.0
        %1428 = vmatpush1.msra.mxu0 %v1402
        %1429 = vmatprep.subr.mxu0 0.0
        %1430 = vmatpush1.msra.mxu0 %v1403
        %1431 = vmatprep.subr.mxu0 0.0
        %1432 = vmatpush1.msra.mxu0 %v1404
        %1433 = vmatprep.subr.mxu0 0.0
        %1434 = vmatpush1.msra.mxu0 %v1405
        %1435 = vmatprep.subr.mxu0 0.0
        %1436 = vmatpush1.msra.mxu0 %v1406
        %1437 = vmatprep.subr.mxu0 0.0
        %1438 = vmatpush1.msra.mxu0 %v1407
        %1439 = vmatprep.subr.mxu0 0.0
        %1440 = vmatpush1.msra.mxu0 %v1408
        %1441 = vmatprep.subr.mxu0 0.0
        %1442 = vmatpush1.msra.mxu0 0.0
        %1443 = vmatprep.subr.mxu0 0.0
        %1444 = vmatpush1.msra.mxu0 0.0
        %1445 = vmatprep.subr.mxu0 0.0
        %1446 = vmatpush1.msra.mxu0 0.0
        %1447 = vmatprep.subr.mxu0 0.0
        %1448 = vmatpush1.msra.mxu0 0.0
        %1449 = vmatprep.subr.mxu0 0.0
        %1450 = vmatpush1.msra.mxu0 0.0
        %1451 = vmatprep.subr.mxu0 0.0
        %1452 = vmatpush1.msra.mxu0 0.0
        %1453 = vmatprep.subr.mxu0 0.0
        %1454 = vmatpush1.msra.mxu0 0.0
        %1455 = vmatprep.subr.mxu0 0.0
        %1456 = vmatpush1.msra.mxu0 0.0
        %1457 = vmatprep.subr.mxu0 0.0
        %1458 = vmatpush1.msra.mxu0 0.0
        %1459 = vmatprep.subr.mxu0 0.0
        %1460 = vmatpush1.msra.mxu0 0.0
        %1461 = vmatprep.subr.mxu0 0.0
        %1462 = vmatpush1.msra.mxu0 0.0
        %1463 = vmatprep.subr.mxu0 0.0
        %1464 = vmatpush1.msra.mxu0 0.0
        %1465 = vmatprep.subr.mxu0 0.0
        %1466 = vmatpush1.msra.mxu0 0.0
        %1467 = vmatprep.subr.mxu0 0.0
        %1468 = vmatpush1.msra.mxu0 0.0
        %1469 = vmatprep.subr.mxu0 0.0
        %1470 = vmatpush1.msra.mxu0 0.0
        %1471 = vmatprep.subr.mxu0 0.0
        %1472 = vmatpush1.msra.mxu0 0.0
        %1473 = vmatprep.mubr.f32.mxu0 0.0
        %1474 = vmatmul.mubr.f32.gmra.mrb[0].mxu0 %v1392
        %v1475 = vpop.f32.mrb[0].mxu0
        %v1476 = vadd.f32 0.0, %v1475
        %v1477 = vpop.f32.mrb[0].mxu0
        %1478 = vdwg.mxu0
        %v1479 = vadd.f32 %v1351, %v1476
        %1480 = vst [vmem:[%s405] sm:$0xff] %v1479
        %s1481 = sand.u32 %s230, 1
        %s1482 = scalar_lea.sflag [#allocation4], %s1481
        %s1483 = sand.u32 %s230, 1
        %s1484 = smul.addr %s1483, 8
        %s1485 = scalar_lea.vmem [#allocation11], %s1484
        // Predicated region
        $region77: #{_forward_padded.1} parent=55 // pred_check
          %p1486 = pneg %p240
        $region78: #{_forward_padded.1} parent=55 // pred_check_branch
          %1488 = sbr.rel (%p1486) target = $region80
        $region79: #{_forward_padded.1} parent=55 // pred_region
          %s1490 = ssub.s32 128, 128
          %1491 = vsyncadd %s1482, %s1490
          %s1492 = smul.addr %s28, 128
          %s1493 = scalar_lea.hbm %s9, %s1492
          %s1495 = sshll.u32 %s1485, 4
          %s1496 = int_to_ptr.vmem [resolvable:$true] %s1495
          %1498 = dma.vmem_to_hbm [thread:$0]  %s1496, 128, %s1493, %s1482
        $region80: #{_forward_padded.1} parent=55 // pred_fallthru
          _
      $region56: #{_forward_padded.1} parent=5 // pred_fallthru
        _
      %p1499 = scmp.le.s32.totalorder 2, %s23
      // Predicated region
      $region81: #{_forward_padded.1} parent=5 // pred_check
        %p1500 = pneg %p1499
      $region82: #{_forward_padded.1} parent=5 // pred_check_branch
        %1502 = sbr.rel (%p1500) target = $region84
      $region83: #{_forward_padded.1} parent=5 // pred_region
        %s1503 = ssub.s32 %s23, 2
        // Predicated region
        $region85: #{_forward_padded.1} parent=83 // pred_check
          %p1504 = pneg %p246
        $region86: #{_forward_padded.1} parent=83 // pred_check_branch
          %1506 = sbr.rel (%p1504) target = $region88
        $region87: #{_forward_padded.1} parent=83 // pred_region
          %s1507 = sand.u32 %s231, 1
          %s1508 = scalar_lea.sflag [#allocation4], %s1507
          %s1509 = sand.u32 %s231, 1
          %s1510 = smul.addr %s1509, 8
          %s1511 = scalar_lea.vmem [#allocation11], %s1510
          %1512 = dma.done %s1508, 128
        $region88: #{_forward_padded.1} parent=83 // pred_fallthru
          _
      $region84: #{_forward_padded.1} parent=5 // pred_fallthru
        _
    $region6: #{_forward_padded.1} parent=1 // loop_footer
      %s27 = sadd.s32 1, %s23
    $region7: #{_forward_padded.1} parent=1 // loop_footer_branch
      %22 = sbr.rel target = $region3
    $region8: #{_forward_padded.1} parent=1 // loop_exit
      _
    %1513 = vsyncpa [#allocation3], 1
    %s1514 = scalar_lea.sflag [#allocation3], 1
    %1515 = vsyncpa %s1514, 1
    %1516 = vsyncpa [#allocation6], 1
    %1517 = vsyncpa [#allocation9], 1
    %1518 = vsyncpa [#allocation4], 1
    %s1519 = scalar_lea.sflag [#allocation4], 1
    %1520 = vsyncpa %s1519, 1

</llo_original>
